<compile_context>
chip_gen: v5e
topology: v5e:2x2
jax: 0.10.0
libtpu: 0.0.40
codegen_flags: <defaults>
</compile_context>

<pallas_src>
import jax
import jax.numpy as jnp
from jax.experimental import pallas as pl
from jax.experimental.pallas import tpu as pltpu


def _round_up(x, m):
    return (x + m - 1) // m * m


def conv2d_relu_forward(x, weight, gamma, beta, *, stride=1, padding=0, eps=1e-5):
    """Forward of Conv2dReLU(use_batchnorm=True): Conv2d(no bias) -> BN(batch stats) -> ReLU."""
    if stride != 1:
        # TODO(synk): general stride needs strided shifted-matmul gathers; only
        # stride=1 (the module default and the test case) is implemented here.
        raise NotImplementedError("conv2d_relu_forward currently supports stride=1 only")

    N, C, H, W = x.shape
    OC, Cw, KH, KW = weight.shape
    assert C == Cw
    HP, WP = H + 2 * padding, W + 2 * padding
    OH, OW = HP - KH + 1, WP - KW + 1

    OCp = _round_up(OC, 128)          # lane-dense output channels
    MV = OH * WP                      # flat outputs per image (incl. KW-1 halo cols/row,
                                      # discarded in the wrapper)
    L = HP * WP
    Lpad = _round_up(L + KW - 1, 8)   # flat padded-image length (+ tail for the last shift)

    # ---- layout prep (one cheap XLA pass; no KH*KW im2col blow-up) -------------
    x_nhwc = jnp.transpose(x, (0, 2, 3, 1))
    xp = jnp.pad(x_nhwc, ((0, 0), (padding, padding), (padding, padding), (0, 0)))
    x_flat = xp.reshape(N, L, C)
    x_flat = jnp.pad(x_flat, ((0, 0), (0, Lpad - L), (0, 0))).astype(jnp.bfloat16)

    # weight [OC, C, KH, KW] -> [KH*KW, C, OCp] bf16 (zero-padded channels)
    w = jnp.transpose(weight, (2, 3, 1, 0)).reshape(KH * KW, C, OC)
    w = jnp.pad(w, ((0, 0), (0, 0), (0, OCp - OC))).astype(jnp.bfloat16)

    # validity mask over the MV flat positions: column index (i % WP) < OW
    col = jnp.arange(MV, dtype=jnp.int32) % WP
    col_mask = (col < OW).astype(jnp.float32).reshape(MV, 1)

    # ---- kernel 1: conv as shifted matmuls + per-image BN-stat partials --------
    def conv_stats_kernel(x_ref, w_ref, mask_ref, y_ref, stats_ref):
        # x_ref: [1, Lpad, C] bf16 ; w_ref: [KH*KW, C, OCp] bf16 ; mask_ref: [MV, 1] f32
        # y_ref: [1, MV, OCp] f32  ; stats_ref: [1, 8, OCp] f32 (row0=sum, row1=sumsq)
        xv = x_ref[0].astype(jnp.float32)      # unpack once; f32 keeps the unaligned
                                               # sublane slices cheap and robust
        acc = jnp.zeros((MV, OCp), jnp.float32)
        for kh in range(KH):
            for kw in range(KW):
                d = kh * WP + kw
                xs = xv[d:d + MV, :].astype(jnp.bfloat16)
                acc = acc + jnp.dot(xs, w_ref[kh * KW + kw],
                                    preferred_element_type=jnp.float32)
        y_ref[0] = acc

        m = mask_ref[...]                       # 0/1 mask for valid (non-halo) columns
        sm = acc * m
        s = jnp.sum(sm, axis=0, keepdims=True)          # [1, OCp]
        sq = jnp.sum(sm * acc, axis=0, keepdims=True)   # [1, OCp]
        stats_ref[0] = jnp.concatenate(
            [s, sq, jnp.zeros((6, OCp), jnp.float32)], axis=0)

    y, stats = pl.pallas_call(
        conv_stats_kernel,
        out_shape=(jax.ShapeDtypeStruct((N, MV, OCp), jnp.float32),
                   jax.ShapeDtypeStruct((N, 8, OCp), jnp.float32)),
        grid_spec=pltpu.PrefetchScalarGridSpec(
            num_scalar_prefetch=0,
            grid=(N,),
            in_specs=[pl.BlockSpec((1, Lpad, C), lambda n: (n, 0, 0)),
                      pl.BlockSpec((KH * KW, C, OCp), lambda n: (0, 0, 0)),
                      pl.BlockSpec((MV, 1), lambda n: (0, 0))],
            out_specs=[pl.BlockSpec((1, MV, OCp), lambda n: (n, 0, 0)),
                       pl.BlockSpec((1, 8, OCp), lambda n: (n, 0, 0))]),
        compiler_params=pltpu.CompilerParams(
            dimension_semantics=("parallel",)),
    )(x_flat, w, col_mask)

    # ---- BN scale/shift from per-image partials (tiny [N, OCp] reduce) ---------
    count = N * OH * OW
    total = jnp.sum(stats[:, 0, :], axis=0)
    total_sq = jnp.sum(stats[:, 1, :], axis=0)
    mean = total / count
    var = jnp.maximum(total_sq / count - mean * mean, 0.0)   # biased, training-mode BN
    gamma_p = jnp.pad(gamma.astype(jnp.float32), (0, OCp - OC), constant_values=1.0)
    beta_p = jnp.pad(beta.astype(jnp.float32), (0, OCp - OC))
    scale_v = gamma_p / jnp.sqrt(var + eps)
    shift_v = beta_p - mean * scale_v
    scale = scale_v.reshape(1, OCp)
    shift = shift_v.reshape(1, OCp)

    # ---- kernel 2: fused BN-affine + ReLU epilogue (lane-dense, f32 math) -------
    def bn_relu_kernel(y_ref, scale_ref, shift_ref, o_ref):
        o_ref[...] = jnp.maximum(y_ref[...] * scale_ref[...] + shift_ref[...], 0.0)

    out_flat = pl.pallas_call(
        bn_relu_kernel,
        out_shape=jax.ShapeDtypeStruct((N, MV, OCp), jnp.float32),
        grid_spec=pltpu.PrefetchScalarGridSpec(
            num_scalar_prefetch=0,
            grid=(N,),
            in_specs=[pl.BlockSpec((1, MV, OCp), lambda n: (n, 0, 0)),
                      pl.BlockSpec((1, OCp), lambda n: (0, 0)),
                      pl.BlockSpec((1, OCp), lambda n: (0, 0))],
            out_specs=pl.BlockSpec((1, MV, OCp), lambda n: (n, 0, 0))),
        compiler_params=pltpu.CompilerParams(
            dimension_semantics=("parallel",)),
    )(y, scale, shift)

    # drop halo columns / channel padding, back to NCHW (small final XLA pass).
    # TODO(synk): callers that accept NHWC can take out_nhwc directly and skip the transpose.
    out_nhwc = out_flat.reshape(N, OH, WP, OCp)[:, :, :OW, :OC]
    return jnp.transpose(out_nhwc, (0, 3, 1, 2))


def _reference(x, weight, gamma, beta, *, stride=1, padding=0, eps=1e-5):
    # Matches the kernel's numerics: bf16 conv inputs, f32 accumulation, f32 BN/ReLU.
    y = jax.lax.conv_general_dilated(
        x.astype(jnp.bfloat16), weight.astype(jnp.bfloat16),
        (stride, stride), [(padding, padding), (padding, padding)],
        dimension_numbers=("NCHW", "OIHW", "NCHW"),
        preferred_element_type=jnp.float32)
    mean = jnp.mean(y, axis=(0, 2, 3), keepdims=True)
    var = jnp.mean((y - mean) ** 2, axis=(0, 2, 3), keepdims=True)
    yn = (y - mean) / jnp.sqrt(var + eps)
    yn = yn * gamma[None, :, None, None] + beta[None, :, None, None]
    return jnp.maximum(yn, 0.0)


def _reference_f32(x, weight, gamma, beta, *, stride=1, padding=0, eps=1e-5):
    y = jax.lax.conv_general_dilated(
        x, weight, (stride, stride), [(padding, padding), (padding, padding)],
        dimension_numbers=("NCHW", "OIHW", "NCHW"))
    mean = jnp.mean(y, axis=(0, 2, 3), keepdims=True)
    var = jnp.mean((y - mean) ** 2, axis=(0, 2, 3), keepdims=True)
    yn = (y - mean) / jnp.sqrt(var + eps)
    yn = yn * gamma[None, :, None, None] + beta[None, :, None, None]
    return jnp.maximum(yn, 0.0)


if __name__ == "__main__":
    # Conv2dReLU(in_channels=4, out_channels=8, kernel_size=3, padding=1,
    #            stride=1, use_batchnorm=True)  -> conv has no bias, BN in train mode.
    key = jax.random.PRNGKey(0)
    kx, kw = jax.random.split(key)

    N, C, H, W = 2, 4, 16, 16
    OC, KH, KW = 8, 3, 3

    x = jax.random.normal(kx, (N, C, H, W), dtype=jnp.float32)
    weight = jax.random.normal(kw, (OC, C, KH, KW), dtype=jnp.float32) * 0.1
    gamma = jnp.ones((OC,), dtype=jnp.float32)   # BatchNorm2d weight init
    beta = jnp.zeros((OC,), dtype=jnp.float32)   # BatchNorm2d bias init

    out = conv2d_relu_forward(x, weight, gamma, beta, stride=1, padding=1)
    out = jax.block_until_ready(out)
    assert out.shape == (N, OC, H, W), out.shape

    ref = _reference(x, weight, gamma, beta, stride=1, padding=1)
    assert jnp.allclose(out, ref, atol=5e-3, rtol=5e-3), "mismatch vs bf16-conv reference"

    ref32 = _reference_f32(x, weight, gamma, beta, stride=1, padding=1)
    assert jnp.allclose(out, ref32, atol=1e-1, rtol=1e-1), "mismatch vs f32 reference"

    print("KERNEL_OK")
</pallas_src>

<mosaic_0001>
module attributes {stable_mosaic.version = 11 : i64} {
  func.func @conv_stats_kernel(%arg0: i32, %arg1: memref<1x328x4xbf16, #tpu.memory_space<vmem>>, %arg2: memref<9x4x128xbf16, #tpu.memory_space<vmem>>, %arg3: memref<288x1xf32, #tpu.memory_space<vmem>>, %arg4: memref<1x288x128xf32, #tpu.memory_space<vmem>>, %arg5: memref<1x8x128xf32, #tpu.memory_space<vmem>>) attributes {dimension_semantics = [#tpu.dimension_semantics<parallel>], iteration_bounds = array<i64: 2>, scalar_prefetch = 0 : i64, scratch_operands = 0 : i64, tpu.core_type = #tpu.core_type<tc>, window_params = [{transform_indices = @transform_0, window_bounds = array<i64: 1, 328, 4>}, {pipeline_mode = #tpu.pipeline_mode<synchronous>, transform_indices = @transform_1, window_bounds = array<i64: 9, 4, 128>}, {pipeline_mode = #tpu.pipeline_mode<synchronous>, transform_indices = @transform_2, window_bounds = array<i64: 288, 1>}, {transform_indices = @transform_3, window_bounds = array<i64: 1, 288, 128>}, {transform_indices = @transform_4, window_bounds = array<i64: 1, 8, 128>}]} {
    %c0 = arith.constant 0 : index
    %c0_0 = arith.constant 0 : index
    %c0_1 = arith.constant 0 : index
    %0 = vector.load %arg1[%c0, %c0_0, %c0_1] : memref<1x328x4xbf16, #tpu.memory_space<vmem>>, vector<1x328x4xbf16>
    %1 = vector.shape_cast %0 : vector<1x328x4xbf16> to vector<328x4xbf16>
    %2 = arith.extf %1 : vector<328x4xbf16> to vector<328x4xf32>
    %cst = arith.constant 0.000000e+00 : f32
    %3 = vector.broadcast %cst : f32 to vector<288x128xf32>
    %4 = vector.extract_strided_slice %2 {offsets = [0, 0], sizes = [288, 4], strides = [1, 1]} : vector<328x4xf32> to vector<288x4xf32>
    %5 = arith.truncf %4 : vector<288x4xf32> to vector<288x4xbf16>
    %c0_2 = arith.constant 0 : index
    %c0_3 = arith.constant 0 : index
    %c0_4 = arith.constant 0 : index
    %6 = vector.load %arg2[%c0_2, %c0_3, %c0_4] : memref<9x4x128xbf16, #tpu.memory_space<vmem>>, vector<1x4x128xbf16>
    %7 = vector.shape_cast %6 : vector<1x4x128xbf16> to vector<4x128xbf16>
    %cst_5 = arith.constant dense<0.000000e+00> : vector<288x128xf32>
    %8 = tpu.matmul %5, %7, %cst_5 {dimension_numbers = #tpu.dot_dimension_numbers<[1], [0], [0], [1], [0, 0, 1, 1], [], []>} : vector<288x4xbf16>, vector<4x128xbf16>, vector<288x128xf32> -> vector<288x128xf32>
    %9 = arith.addf %3, %8 : vector<288x128xf32>
    %10 = vector.extract_strided_slice %2 {offsets = [1, 0], sizes = [288, 4], strides = [1, 1]} : vector<328x4xf32> to vector<288x4xf32>
    %11 = arith.truncf %10 : vector<288x4xf32> to vector<288x4xbf16>
    %c1 = arith.constant 1 : index
    %c0_6 = arith.constant 0 : index
    %c0_7 = arith.constant 0 : index
    %12 = vector.load %arg2[%c1, %c0_6, %c0_7] : memref<9x4x128xbf16, #tpu.memory_space<vmem>>, vector<1x4x128xbf16>
    %13 = vector.shape_cast %12 : vector<1x4x128xbf16> to vector<4x128xbf16>
    %cst_8 = arith.constant dense<0.000000e+00> : vector<288x128xf32>
    %14 = tpu.matmul %11, %13, %cst_8 {dimension_numbers = #tpu.dot_dimension_numbers<[1], [0], [0], [1], [0, 0, 1, 1], [], []>} : vector<288x4xbf16>, vector<4x128xbf16>, vector<288x128xf32> -> vector<288x128xf32>
    %15 = arith.addf %9, %14 : vector<288x128xf32>
    %16 = vector.extract_strided_slice %2 {offsets = [2, 0], sizes = [288, 4], strides = [1, 1]} : vector<328x4xf32> to vector<288x4xf32>
    %17 = arith.truncf %16 : vector<288x4xf32> to vector<288x4xbf16>
    %c2 = arith.constant 2 : index
    %c0_9 = arith.constant 0 : index
    %c0_10 = arith.constant 0 : index
    %18 = vector.load %arg2[%c2, %c0_9, %c0_10] : memref<9x4x128xbf16, #tpu.memory_space<vmem>>, vector<1x4x128xbf16>
    %19 = vector.shape_cast %18 : vector<1x4x128xbf16> to vector<4x128xbf16>
    %cst_11 = arith.constant dense<0.000000e+00> : vector<288x128xf32>
    %20 = tpu.matmul %17, %19, %cst_11 {dimension_numbers = #tpu.dot_dimension_numbers<[1], [0], [0], [1], [0, 0, 1, 1], [], []>} : vector<288x4xbf16>, vector<4x128xbf16>, vector<288x128xf32> -> vector<288x128xf32>
    %21 = arith.addf %15, %20 : vector<288x128xf32>
    %22 = vector.extract_strided_slice %2 {offsets = [18, 0], sizes = [288, 4], strides = [1, 1]} : vector<328x4xf32> to vector<288x4xf32>
    %23 = arith.truncf %22 : vector<288x4xf32> to vector<288x4xbf16>
    %c3 = arith.constant 3 : index
    %c0_12 = arith.constant 0 : index
    %c0_13 = arith.constant 0 : index
    %24 = vector.load %arg2[%c3, %c0_12, %c0_13] : memref<9x4x128xbf16, #tpu.memory_space<vmem>>, vector<1x4x128xbf16>
    %25 = vector.shape_cast %24 : vector<1x4x128xbf16> to vector<4x128xbf16>
    %cst_14 = arith.constant dense<0.000000e+00> : vector<288x128xf32>
    %26 = tpu.matmul %23, %25, %cst_14 {dimension_numbers = #tpu.dot_dimension_numbers<[1], [0], [0], [1], [0, 0, 1, 1], [], []>} : vector<288x4xbf16>, vector<4x128xbf16>, vector<288x128xf32> -> vector<288x128xf32>
    %27 = arith.addf %21, %26 : vector<288x128xf32>
    %28 = vector.extract_strided_slice %2 {offsets = [19, 0], sizes = [288, 4], strides = [1, 1]} : vector<328x4xf32> to vector<288x4xf32>
    %29 = arith.truncf %28 : vector<288x4xf32> to vector<288x4xbf16>
    %c4 = arith.constant 4 : index
    %c0_15 = arith.constant 0 : index
    %c0_16 = arith.constant 0 : index
    %30 = vector.load %arg2[%c4, %c0_15, %c0_16] : memref<9x4x128xbf16, #tpu.memory_space<vmem>>, vector<1x4x128xbf16>
    %31 = vector.shape_cast %30 : vector<1x4x128xbf16> to vector<4x128xbf16>
    %cst_17 = arith.constant dense<0.000000e+00> : vector<288x128xf32>
    %32 = tpu.matmul %29, %31, %cst_17 {dimension_numbers = #tpu.dot_dimension_numbers<[1], [0], [0], [1], [0, 0, 1, 1], [], []>} : vector<288x4xbf16>, vector<4x128xbf16>, vector<288x128xf32> -> vector<288x128xf32>
    %33 = arith.addf %27, %32 : vector<288x128xf32>
    %34 = vector.extract_strided_slice %2 {offsets = [20, 0], sizes = [288, 4], strides = [1, 1]} : vector<328x4xf32> to vector<288x4xf32>
    %35 = arith.truncf %34 : vector<288x4xf32> to vector<288x4xbf16>
    %c5 = arith.constant 5 : index
    %c0_18 = arith.constant 0 : index
    %c0_19 = arith.constant 0 : index
    %36 = vector.load %arg2[%c5, %c0_18, %c0_19] : memref<9x4x128xbf16, #tpu.memory_space<vmem>>, vector<1x4x128xbf16>
    %37 = vector.shape_cast %36 : vector<1x4x128xbf16> to vector<4x128xbf16>
    %cst_20 = arith.constant dense<0.000000e+00> : vector<288x128xf32>
    %38 = tpu.matmul %35, %37, %cst_20 {dimension_numbers = #tpu.dot_dimension_numbers<[1], [0], [0], [1], [0, 0, 1, 1], [], []>} : vector<288x4xbf16>, vector<4x128xbf16>, vector<288x128xf32> -> vector<288x128xf32>
    %39 = arith.addf %33, %38 : vector<288x128xf32>
    %40 = vector.extract_strided_slice %2 {offsets = [36, 0], sizes = [288, 4], strides = [1, 1]} : vector<328x4xf32> to vector<288x4xf32>
    %41 = arith.truncf %40 : vector<288x4xf32> to vector<288x4xbf16>
    %c6 = arith.constant 6 : index
    %c0_21 = arith.constant 0 : index
    %c0_22 = arith.constant 0 : index
    %42 = vector.load %arg2[%c6, %c0_21, %c0_22] : memref<9x4x128xbf16, #tpu.memory_space<vmem>>, vector<1x4x128xbf16>
    %43 = vector.shape_cast %42 : vector<1x4x128xbf16> to vector<4x128xbf16>
    %cst_23 = arith.constant dense<0.000000e+00> : vector<288x128xf32>
    %44 = tpu.matmul %41, %43, %cst_23 {dimension_numbers = #tpu.dot_dimension_numbers<[1], [0], [0], [1], [0, 0, 1, 1], [], []>} : vector<288x4xbf16>, vector<4x128xbf16>, vector<288x128xf32> -> vector<288x128xf32>
    %45 = arith.addf %39, %44 : vector<288x128xf32>
    %46 = vector.extract_strided_slice %2 {offsets = [37, 0], sizes = [288, 4], strides = [1, 1]} : vector<328x4xf32> to vector<288x4xf32>
    %47 = arith.truncf %46 : vector<288x4xf32> to vector<288x4xbf16>
    %c7 = arith.constant 7 : index
    %c0_24 = arith.constant 0 : index
    %c0_25 = arith.constant 0 : index
    %48 = vector.load %arg2[%c7, %c0_24, %c0_25] : memref<9x4x128xbf16, #tpu.memory_space<vmem>>, vector<1x4x128xbf16>
    %49 = vector.shape_cast %48 : vector<1x4x128xbf16> to vector<4x128xbf16>
    %cst_26 = arith.constant dense<0.000000e+00> : vector<288x128xf32>
    %50 = tpu.matmul %47, %49, %cst_26 {dimension_numbers = #tpu.dot_dimension_numbers<[1], [0], [0], [1], [0, 0, 1, 1], [], []>} : vector<288x4xbf16>, vector<4x128xbf16>, vector<288x128xf32> -> vector<288x128xf32>
    %51 = arith.addf %45, %50 : vector<288x128xf32>
    %52 = vector.extract_strided_slice %2 {offsets = [38, 0], sizes = [288, 4], strides = [1, 1]} : vector<328x4xf32> to vector<288x4xf32>
    %53 = arith.truncf %52 : vector<288x4xf32> to vector<288x4xbf16>
    %c8 = arith.constant 8 : index
    %c0_27 = arith.constant 0 : index
    %c0_28 = arith.constant 0 : index
    %54 = vector.load %arg2[%c8, %c0_27, %c0_28] : memref<9x4x128xbf16, #tpu.memory_space<vmem>>, vector<1x4x128xbf16>
    %55 = vector.shape_cast %54 : vector<1x4x128xbf16> to vector<4x128xbf16>
    %cst_29 = arith.constant dense<0.000000e+00> : vector<288x128xf32>
    %56 = tpu.matmul %53, %55, %cst_29 {dimension_numbers = #tpu.dot_dimension_numbers<[1], [0], [0], [1], [0, 0, 1, 1], [], []>} : vector<288x4xbf16>, vector<4x128xbf16>, vector<288x128xf32> -> vector<288x128xf32>
    %57 = arith.addf %51, %56 : vector<288x128xf32>
    %c0_30 = arith.constant 0 : index
    %c0_31 = arith.constant 0 : index
    %c0_32 = arith.constant 0 : index
    %58 = vector.load %arg4[%c0_30, %c0_31, %c0_32] : memref<1x288x128xf32, #tpu.memory_space<vmem>>, vector<1x288x128xf32>
    %59 = vector.shape_cast %58 : vector<1x288x128xf32> to vector<288x128xf32>
    %60 = vector.shape_cast %57 : vector<288x128xf32> to vector<1x288x128xf32>
    tpu.vector_store %arg4[%c0_30, %c0_31, %c0_32], %60 {strides = array<i32>} : memref<1x288x128xf32, #tpu.memory_space<vmem>>, vector<1x288x128xf32>,
    %c0_33 = arith.constant 0 : index
    %c0_34 = arith.constant 0 : index
    %61 = vector.load %arg3[%c0_33, %c0_34] : memref<288x1xf32, #tpu.memory_space<vmem>>, vector<288x1xf32>
    %62 = vector.broadcast %61 : vector<288x1xf32> to vector<288x128xf32>
    %63 = arith.mulf %57, %62 : vector<288x128xf32>
    %cst_35 = arith.constant dense<0.000000e+00> : vector<128xf32>
    %64 = vector.multi_reduction <add>, %63, %cst_35 [0] : vector<288x128xf32> to vector<128xf32>
    %65 = vector.shape_cast %64 : vector<128xf32> to vector<1x128xf32>
    %66 = arith.mulf %63, %57 : vector<288x128xf32>
    %cst_36 = arith.constant dense<0.000000e+00> : vector<128xf32>
    %67 = vector.multi_reduction <add>, %66, %cst_36 [0] : vector<288x128xf32> to vector<128xf32>
    %68 = vector.shape_cast %67 : vector<128xf32> to vector<1x128xf32>
    %cst_37 = arith.constant 0.000000e+00 : f32
    %69 = vector.broadcast %cst_37 : f32 to vector<6x128xf32>
    %70 = tpu.concatenate %65, %68, %69 in 0 : vector<1x128xf32>, vector<1x128xf32>, vector<6x128xf32> -> vector<8x128xf32>
    %c0_38 = arith.constant 0 : index
    %c0_39 = arith.constant 0 : index
    %c0_40 = arith.constant 0 : index
    %71 = vector.load %arg5[%c0_38, %c0_39, %c0_40] : memref<1x8x128xf32, #tpu.memory_space<vmem>>, vector<1x8x128xf32>
    %72 = vector.shape_cast %71 : vector<1x8x128xf32> to vector<8x128xf32>
    %73 = vector.shape_cast %70 : vector<8x128xf32> to vector<1x8x128xf32>
    tpu.vector_store %arg5[%c0_38, %c0_39, %c0_40], %73 {strides = array<i32>} : memref<1x8x128xf32, #tpu.memory_space<vmem>>, vector<1x8x128xf32>,
    return
  }
  func.func @transform_0(%arg0: i32) -> (i32, i32, i32) {
    %c0_i32 = arith.constant 0 : i32
    %c0_i32_0 = arith.constant 0 : i32
    %c0_i32_1 = arith.constant 0 : i32
    return %arg0, %c0_i32, %c0_i32_0 : i32, i32, i32
  }
  func.func @transform_1(%arg0: i32) -> (i32, i32, i32) {
    %c0_i32 = arith.constant 0 : i32
    %c0_i32_0 = arith.constant 0 : i32
    %c0_i32_1 = arith.constant 0 : i32
    %c0_i32_2 = arith.constant 0 : i32
    return %c0_i32, %c0_i32_0, %c0_i32_1 : i32, i32, i32
  }
  func.func @transform_2(%arg0: i32) -> (i32, i32) {
    %c0_i32 = arith.constant 0 : i32
    %c0_i32_0 = arith.constant 0 : i32
    %c0_i32_1 = arith.constant 0 : i32
    return %c0_i32, %c0_i32_0 : i32, i32
  }
  func.func @transform_3(%arg0: i32) -> (i32, i32, i32) {
    %c0_i32 = arith.constant 0 : i32
    %c0_i32_0 = arith.constant 0 : i32
    %c0_i32_1 = arith.constant 0 : i32
    return %arg0, %c0_i32, %c0_i32_0 : i32, i32, i32
  }
  func.func @transform_4(%arg0: i32) -> (i32, i32, i32) {
    %c0_i32 = arith.constant 0 : i32
    %c0_i32_0 = arith.constant 0 : i32
    %c0_i32_1 = arith.constant 0 : i32
    return %arg0, %c0_i32, %c0_i32_0 : i32, i32, i32
  }
}

</mosaic_0001>

<llo_original>
// kernel: tpu_custom_call.1
$region0: #{tpu_custom_call.1}
  #allocation0 [shape = 'u32[]', space=smem, size = 0x4, offset = 0x4, fixed_abs, tag = 'smem constant byte address 0x4 - core index']
  #allocation1 [shape = 'u32[72,128]{1,0:T(1,128)}', space=vmem, size = 0x9000, scoped, tag = 'internal scratch']
  %s0 = inlined_call_operand.vmem [shape: bf16[2,328,4], index: 0, kind: input, shape index: {}]
  %s1 = inlined_call_operand.vmem [shape: bf16[9,4,128], index: 1, kind: input, shape index: {}]
  %s2 = inlined_call_operand.vmem [shape: f32[288,1], index: 2, kind: input, shape index: {}]
  %s3 = inlined_call_operand.hbm [shape: f32[2,288,128], index: 3, kind: output, shape index: {0}]
  %s4 = inlined_call_operand.hbm [shape: f32[2,8,128], index: 4, kind: output, shape index: {1}]
  %5 = xla_tuple %s3, %s4
  %s6 = sld [smem:[#allocation0]]
  $region53: #{tpu_custom_call.1} parent=0
    _
  %s8 = ssub.s32 1, %s6
  %s9 = scalar_select 0, %s8, %s6
  $region1: #{tpu_custom_call.1} parent=0
    #allocation2 [shape = 'u8[294912]{0}', space=vmem, size = 0x48000, scoped, tag = 'output window, operand 0']
    #allocation3 [shape = 's32[2]{0}', space=sflag, size = 0x8, scoped, tag = 'scoped memory for tpu_custom_call.1']
    #allocation4 [shape = 'u8[8192]{0}', space=vmem, size = 0x2000, scoped, tag = 'output window, operand 1']
    #allocation5 [shape = 's32[2]{0}', space=sflag, size = 0x8, scoped, tag = 'scoped memory for tpu_custom_call.1']
    %10 = vsyncpa [#allocation3], 0
    %s11 = scalar_lea.sflag [#allocation3], 1
    %12 = vsyncpa %s11, 0
    %13 = vsyncpa [#allocation5], 0
    %s14 = scalar_lea.sflag [#allocation5], 1
    %15 = vsyncpa %s14, 0
    loop: start=0, step=1, limit=4
    $region2: #{tpu_custom_call.1} parent=1 // loop_pre_header
      _
    $region3: #{tpu_custom_call.1} parent=1 // loop_header
      %s17 = sphi 0, %s21
      %p18 = scmp.ge.s32.totalorder %s17, 4
      %s27 = sphi 0, %s29
      %s30 = sphi 0, %s27
      %s31 = sphi 0, %s30
      %s47 = sphi 0, %s31
      %s51 = sphi 0, %s51
      %s53 = sphi 0, %s51
      %s54 = sphi 0, %s53
      %s68 = sphi 0, %s54
      %s72 = sphi 0, %s72
      %s74 = sphi 0, %s72
      %s75 = sphi 0, %s74
      %s89 = sphi 0, %s75
      %s95 = sphi 0, %s97
      %s98 = sphi 0, %s95
      %s99 = sphi 0, %s98
      %s115 = sphi 0, %s99
      %s121 = sphi 0, %s123
      %s124 = sphi 0, %s121
      %s125 = sphi 0, %s124
      %s141 = sphi 0, %s125
    $region4: #{tpu_custom_call.1} parent=1 // loop_header_branch
      %20 = sbr.rel (%p18) target = $region8
    $region5: #{tpu_custom_call.1} parent=1 // loop_body
      %s22 = ssub.s32 %s17, 1
      %s23 = ssub.s32 %s17, 2
      %s24 = sadd.s32 %s17, 1
      %s25 = ssub.s32 %s17, %s24
      %p26 = scmp.eq.s32.totalorder %s25, 0
      %s28 = sadd.s32 %s27, 1
      %s29 = scalar_select %p26, %s27, %s28
      %p32 = pneg %p26
      %p33 = scmp.eq.s32.totalorder %s17, 1
      %p34 = por %p32, %p33
      %p35 = scmp.ne.s32.totalorder %s27, %s30
      %p36 = scmp.eq.s32.totalorder %s17, 0
      %p37 = por %p35, %p36
      %p38 = scmp.ne.s32.totalorder %s27, %s30
      %p39 = scmp.eq.s32.totalorder %s22, 1
      %p40 = por %p38, %p39
      %p41 = scmp.ne.s32.totalorder %s30, %s31
      %p42 = scmp.eq.s32.totalorder %s22, 0
      %p43 = por %p41, %p42
      %p44 = scmp.ne.s32.totalorder %s30, %s31
      %p45 = scmp.eq.s32.totalorder %s23, 1
      %p46 = por %p44, %p45
      %p48 = scmp.ne.s32.totalorder %s31, %s47
      %p49 = scmp.eq.s32.totalorder %s23, 0
      %p50 = por %p48, %p49
      %s52 = sadd.s32 %s51, 1
      %p55 = scmp.eq.s32.totalorder %s17, 1
      %p56 = scmp.ne.s32.totalorder %s51, %s53
      %p57 = scmp.eq.s32.totalorder %s17, 0
      %p58 = por %p56, %p57
      %p59 = scmp.ne.s32.totalorder %s51, %s53
      %p60 = scmp.eq.s32.totalorder %s22, 1
      %p61 = por %p59, %p60
      %p62 = scmp.ne.s32.totalorder %s53, %s54
      %p63 = scmp.eq.s32.totalorder %s22, 0
      %p64 = por %p62, %p63
      %p65 = scmp.ne.s32.totalorder %s53, %s54
      %p66 = scmp.eq.s32.totalorder %s23, 1
      %p67 = por %p65, %p66
      %p69 = scmp.ne.s32.totalorder %s54, %s68
      %p70 = scmp.eq.s32.totalorder %s23, 0
      %p71 = por %p69, %p70
      %s73 = sadd.s32 %s72, 1
      %p76 = scmp.eq.s32.totalorder %s17, 1
      %p77 = scmp.ne.s32.totalorder %s72, %s74
      %p78 = scmp.eq.s32.totalorder %s17, 0
      %p79 = por %p77, %p78
      %p80 = scmp.ne.s32.totalorder %s72, %s74
      %p81 = scmp.eq.s32.totalorder %s22, 1
      %p82 = por %p80, %p81
      %p83 = scmp.ne.s32.totalorder %s74, %s75
      %p84 = scmp.eq.s32.totalorder %s22, 0
      %p85 = por %p83, %p84
      %p86 = scmp.ne.s32.totalorder %s74, %s75
      %p87 = scmp.eq.s32.totalorder %s23, 1
      %p88 = por %p86, %p87
      %p90 = scmp.ne.s32.totalorder %s75, %s89
      %p91 = scmp.eq.s32.totalorder %s23, 0
      %p92 = por %p90, %p91
      %s93 = ssub.s32 %s17, %s24
      %p94 = scmp.eq.s32.totalorder %s93, 0
      %s96 = sadd.s32 %s95, 1
      %s97 = scalar_select %p94, %s95, %s96
      %p100 = pneg %p94
      %p101 = scmp.eq.s32.totalorder %s17, 1
      %p102 = por %p100, %p101
      %p103 = scmp.ne.s32.totalorder %s95, %s98
      %p104 = scmp.eq.s32.totalorder %s17, 0
      %p105 = por %p103, %p104
      %p106 = scmp.ne.s32.totalorder %s95, %s98
      %p107 = scmp.eq.s32.totalorder %s22, 1
      %p108 = por %p106, %p107
      %p109 = scmp.ne.s32.totalorder %s98, %s99
      %p110 = scmp.eq.s32.totalorder %s22, 0
      %p111 = por %p109, %p110
      %p112 = scmp.ne.s32.totalorder %s98, %s99
      %p113 = scmp.eq.s32.totalorder %s23, 1
      %p114 = por %p112, %p113
      %p116 = scmp.ne.s32.totalorder %s99, %s115
      %p117 = scmp.eq.s32.totalorder %s23, 0
      %p118 = por %p116, %p117
      %s119 = ssub.s32 %s17, %s24
      %p120 = scmp.eq.s32.totalorder %s119, 0
      %s122 = sadd.s32 %s121, 1
      %s123 = scalar_select %p120, %s121, %s122
      %p126 = pneg %p120
      %p127 = scmp.eq.s32.totalorder %s17, 1
      %p128 = por %p126, %p127
      %p129 = scmp.ne.s32.totalorder %s121, %s124
      %p130 = scmp.eq.s32.totalorder %s17, 0
      %p131 = por %p129, %p130
      %p132 = scmp.ne.s32.totalorder %s121, %s124
      %p133 = scmp.eq.s32.totalorder %s22, 1
      %p134 = por %p132, %p133
      %p135 = scmp.ne.s32.totalorder %s124, %s125
      %p136 = scmp.eq.s32.totalorder %s22, 0
      %p137 = por %p135, %p136
      %p138 = scmp.ne.s32.totalorder %s124, %s125
      %p139 = scmp.eq.s32.totalorder %s23, 1
      %p140 = por %p138, %p139
      %p142 = scmp.ne.s32.totalorder %s125, %s141
      %p143 = scmp.eq.s32.totalorder %s23, 0
      %p144 = por %p142, %p143
      %p145 = scmp.le.s32.totalorder 1, %s17
      %p146 = scmp.lt.s32.totalorder %s17, 3
      %p147 = pnand %p145, %p146
      %p148 = pneg %p147
      // Predicated region
      $region9: #{tpu_custom_call.1} parent=5 // pred_check
        _
      $region10: #{tpu_custom_call.1} parent=5 // pred_check_branch
        %150 = sbr.rel (%p147) target = $region12
      $region11: #{tpu_custom_call.1} parent=5 // pred_region
        %s151 = ssub.s32 %s17, 1
        // Predicated region
        $region13: #{tpu_custom_call.1} parent=11 // pred_check
          %p152 = pneg %p64
        $region14: #{tpu_custom_call.1} parent=11 // pred_check_branch
          %154 = sbr.rel (%p152) target = $region16
        $region15: #{tpu_custom_call.1} parent=11 // pred_region
          _
        $region16: #{tpu_custom_call.1} parent=11 // pred_fallthru
          _
        // Predicated region
        $region17: #{tpu_custom_call.1} parent=11 // pred_check
          %p155 = pneg %p85
        $region18: #{tpu_custom_call.1} parent=11 // pred_check_branch
          %157 = sbr.rel (%p155) target = $region20
        $region19: #{tpu_custom_call.1} parent=11 // pred_region
          _
        $region20: #{tpu_custom_call.1} parent=11 // pred_fallthru
          _
      $region12: #{tpu_custom_call.1} parent=5 // pred_fallthru
        _
      %p158 = scmp.lt.s32.totalorder %s17, 2
      // Predicated region
      $region21: #{tpu_custom_call.1} parent=5 // pred_check
        %p159 = pneg %p158
      $region22: #{tpu_custom_call.1} parent=5 // pred_check_branch
        %161 = sbr.rel (%p159) target = $region24
      $region23: #{tpu_custom_call.1} parent=5 // pred_region
        // Predicated region
        $region25: #{tpu_custom_call.1} parent=23 // pred_check
          %p162 = pneg %p37
        $region26: #{tpu_custom_call.1} parent=23 // pred_check_branch
          %164 = sbr.rel (%p162) target = $region28
        $region27: #{tpu_custom_call.1} parent=23 // pred_region
          %p165 = scmp.lt.s32.totalorder %s17, 1
          %s166 = scalar_select %p165, %s17, 1
          %s167 = smul.addr %s166, 41
          %s168 = smul.addr %s167, 4
          %s169 = scalar_lea.vmem %s0, %s168
        $region28: #{tpu_custom_call.1} parent=23 // pred_fallthru
          _
      $region24: #{tpu_custom_call.1} parent=5 // pred_fallthru
        _
      %p170 = scmp.le.s32.totalorder 1, %s17
      %p171 = scmp.lt.s32.totalorder %s17, 3
      %p172 = pnand %p170, %p171
      %p173 = pneg %p172
      // Predicated region
      $region29: #{tpu_custom_call.1} parent=5 // pred_check
        _
      $region30: #{tpu_custom_call.1} parent=5 // pred_check_branch
        %175 = sbr.rel (%p172) target = $region32
      $region31: #{tpu_custom_call.1} parent=5 // pred_region
        %s176 = ssub.s32 %s17, 1
        %p177 = scmp.lt.s32.totalorder %s22, 1
        %s178 = scalar_select %p177, %s22, 1
        %s179 = smul.addr %s178, 41
        %s180 = smul.addr %s179, 4
        %s181 = scalar_lea.vmem %s0, %s180
        %p182 = pneg %p43
        %p183 = pneg %p40
        %p184 = pneg %p64
        %p185 = pneg %p61
        %p186 = pneg %p85
        %p187 = pneg %p82
        %p188 = pneg %p111
        %p189 = pneg %p108
        %s190 = sand.u32 %s98, 1
        %s191 = scalar_lea.sflag [#allocation3], %s190
        %s192 = sand.u32 %s98, 1
        %s193 = smul.addr %s192, 288
        %s194 = scalar_lea.vmem [#allocation2], %s193
        %p195 = pneg %p137
        %p196 = pneg %p134
        %s197 = sand.u32 %s124, 1
        %s198 = scalar_lea.sflag [#allocation5], %s197
        %s199 = sand.u32 %s124, 1
        %s200 = smul.addr %s199, 8
        %s201 = scalar_lea.vmem [#allocation4], %s200
        %p202 = scmp.lt.s32.totalorder %s22, 1
        %s203 = scalar_select %p202, %s22, 1
        %s204 = smul.addr %s203, 41
        %s205 = smul.addr %s204, 4
        %s206 = scalar_lea.vmem %s0, %s205
        %v208 = vld [vmem:[%s206] sm:$0xf]
        %v209 = vld [vmem:[%s206 + $0x4] sm:$0xf]
        %v210 = vld [vmem:[%s206 + $0x8] sm:$0xf]
        %v211 = vld [vmem:[%s206 + $0xc] sm:$0xf]
        %v212 = vld [vmem:[%s206 + $0x10] sm:$0xf]
        %v213 = vld [vmem:[%s206 + $0x14] sm:$0xf]
        %v214 = vld [vmem:[%s206 + $0x18] sm:$0xf]
        %v215 = vld [vmem:[%s206 + $0x1c] sm:$0xf]
        %v216 = vld [vmem:[%s206 + $0x20] sm:$0xf]
        %v217 = vld [vmem:[%s206 + $0x24] sm:$0xf]
        %v218 = vld [vmem:[%s206 + $0x28] sm:$0xf]
        %v219 = vld [vmem:[%s206 + $0x2c] sm:$0xf]
        %v220 = vld [vmem:[%s206 + $0x30] sm:$0xf]
        %v221 = vld [vmem:[%s206 + $0x34] sm:$0xf]
        %v222 = vld [vmem:[%s206 + $0x38] sm:$0xf]
        %v223 = vld [vmem:[%s206 + $0x3c] sm:$0xf]
        %v224 = vld [vmem:[%s206 + $0x40] sm:$0xf]
        %v225 = vld [vmem:[%s206 + $0x44] sm:$0xf]
        %v226 = vld [vmem:[%s206 + $0x48] sm:$0xf]
        %v227 = vld [vmem:[%s206 + $0x4c] sm:$0xf]
        %v228 = vld [vmem:[%s206 + $0x50] sm:$0xf]
        %v229 = vld [vmem:[%s206 + $0x54] sm:$0xf]
        %v230 = vld [vmem:[%s206 + $0x58] sm:$0xf]
        %v231 = vld [vmem:[%s206 + $0x5c] sm:$0xf]
        %v232 = vld [vmem:[%s206 + $0x60] sm:$0xf]
        %v233 = vld [vmem:[%s206 + $0x64] sm:$0xf]
        %v234 = vld [vmem:[%s206 + $0x68] sm:$0xf]
        %v235 = vld [vmem:[%s206 + $0x6c] sm:$0xf]
        %v236 = vld [vmem:[%s206 + $0x70] sm:$0xf]
        %v237 = vld [vmem:[%s206 + $0x74] sm:$0xf]
        %v238 = vld [vmem:[%s206 + $0x78] sm:$0xf]
        %v239 = vld [vmem:[%s206 + $0x7c] sm:$0xf]
        %v240 = vld [vmem:[%s206 + $0x80] sm:$0xf]
        %v241 = vld [vmem:[%s206 + $0x84] sm:$0xf]
        %v242 = vld [vmem:[%s206 + $0x88] sm:$0xf]
        %v243 = vld [vmem:[%s206 + $0x8c] sm:$0xf]
        %v244 = vld [vmem:[%s206 + $0x90] sm:$0xf]
        %v245 = vld [vmem:[%s206 + $0x94] sm:$0xf]
        %v246 = vld [vmem:[%s206 + $0x98] sm:$0xf]
        %v247 = vld [vmem:[%s206 + $0x9c] sm:$0xf]
        %v248 = vld [vmem:[%s206 + $0xa0] sm:$0xf]
        %v249 = vunpack.c.l.bf16 %v208
        %v250 = vunpack.c.l.bf16 %v209
        %v251 = vunpack.c.l.bf16 %v210
        %v252 = vunpack.c.l.bf16 %v211
        %v253 = vunpack.c.l.bf16 %v212
        %v254 = vunpack.c.l.bf16 %v213
        %v255 = vunpack.c.l.bf16 %v214
        %v256 = vunpack.c.l.bf16 %v215
        %v257 = vunpack.c.l.bf16 %v216
        %v258 = vunpack.c.l.bf16 %v217
        %v259 = vunpack.c.l.bf16 %v218
        %v260 = vunpack.c.l.bf16 %v219
        %v261 = vunpack.c.l.bf16 %v220
        %v262 = vunpack.c.l.bf16 %v221
        %v263 = vunpack.c.l.bf16 %v222
        %v264 = vunpack.c.l.bf16 %v223
        %v265 = vunpack.c.l.bf16 %v224
        %v266 = vunpack.c.l.bf16 %v225
        %v267 = vunpack.c.l.bf16 %v226
        %v268 = vunpack.c.l.bf16 %v227
        %v269 = vunpack.c.l.bf16 %v228
        %v270 = vunpack.c.l.bf16 %v229
        %v271 = vunpack.c.l.bf16 %v230
        %v272 = vunpack.c.l.bf16 %v231
        %v273 = vunpack.c.l.bf16 %v232
        %v274 = vunpack.c.l.bf16 %v233
        %v275 = vunpack.c.l.bf16 %v234
        %v276 = vunpack.c.l.bf16 %v235
        %v277 = vunpack.c.l.bf16 %v236
        %v278 = vunpack.c.l.bf16 %v237
        %v279 = vunpack.c.l.bf16 %v238
        %v280 = vunpack.c.l.bf16 %v239
        %v281 = vunpack.c.l.bf16 %v240
        %v282 = vunpack.c.l.bf16 %v241
        %v283 = vunpack.c.l.bf16 %v242
        %v284 = vunpack.c.l.bf16 %v243
        %v285 = vunpack.c.l.bf16 %v244
        %v286 = vunpack.c.l.bf16 %v245
        %v287 = vunpack.c.l.bf16 %v246
        %v288 = vunpack.c.l.bf16 %v247
        %v289 = vunpack.c.l.bf16 %v248
        %v290 = vpack.c.bf16 %v250, %v249
        %v291 = vpack.c.bf16 %v252, %v251
        %v292 = vpack.c.bf16 %v254, %v253
        %v293 = vpack.c.bf16 %v256, %v255
        %v294 = vpack.c.bf16 %v258, %v257
        %v295 = vpack.c.bf16 %v260, %v259
        %v296 = vpack.c.bf16 %v262, %v261
        %v297 = vpack.c.bf16 %v264, %v263
        %v298 = vpack.c.bf16 %v266, %v265
        %v299 = vpack.c.bf16 %v268, %v267
        %v300 = vpack.c.bf16 %v270, %v269
        %v301 = vpack.c.bf16 %v272, %v271
        %v302 = vpack.c.bf16 %v274, %v273
        %v303 = vpack.c.bf16 %v276, %v275
        %v304 = vpack.c.bf16 %v278, %v277
        %v305 = vpack.c.bf16 %v280, %v279
        %v306 = vpack.c.bf16 %v282, %v281
        %v307 = vpack.c.bf16 %v284, %v283
        %v308 = vld [vmem:[%s1] sm:$0x3]
        %v309 = vpack.c.bf16 %v285, %v285
        %s310 = scalar_lea.vmem %s1, 2
        %v311 = vld [vmem:[%s310] sm:$0x3]
        %vm312 = vsmask.f32 7424
        %v314 = vshrl.u32 %v290, 16
        %v316 = vshll.u32 %v290, 16
        %v318 = vrot.slane %v316, 1
        %v319 = vor.u32 %v314, %v318
        %v321 = vshll.u32 %v291, 16
        %v323 = vrot.slane %v321, 1
        %v324 = vsel %vm312, %v319, %v323
        %v325 = vshrl.u32 %v291, 16
        %v327 = vor.u32 %v325, %v323
        %v329 = vshll.u32 %v292, 16
        %v331 = vrot.slane %v329, 1
        %v332 = vsel %vm312, %v327, %v331
        %v333 = vshrl.u32 %v292, 16
        %v335 = vor.u32 %v333, %v331
        %v337 = vshll.u32 %v293, 16
        %v339 = vrot.slane %v337, 1
        %v340 = vsel %vm312, %v335, %v339
        %v341 = vshrl.u32 %v293, 16
        %v343 = vor.u32 %v341, %v339
        %v345 = vshll.u32 %v294, 16
        %v347 = vrot.slane %v345, 1
        %v348 = vsel %vm312, %v343, %v347
        %v349 = vshrl.u32 %v294, 16
        %v351 = vor.u32 %v349, %v347
        %v353 = vshll.u32 %v295, 16
        %v355 = vrot.slane %v353, 1
        %v356 = vsel %vm312, %v351, %v355
        %v357 = vshrl.u32 %v295, 16
        %v359 = vor.u32 %v357, %v355
        %v361 = vshll.u32 %v296, 16
        %v363 = vrot.slane %v361, 1
        %v364 = vsel %vm312, %v359, %v363
        %v365 = vshrl.u32 %v296, 16
        %v367 = vor.u32 %v365, %v363
        %v369 = vshll.u32 %v297, 16
        %v371 = vrot.slane %v369, 1
        %v372 = vsel %vm312, %v367, %v371
        %v373 = vshrl.u32 %v297, 16
        %v375 = vor.u32 %v373, %v371
        %v377 = vshll.u32 %v298, 16
        %v379 = vrot.slane %v377, 1
        %v380 = vsel %vm312, %v375, %v379
        %v381 = vshrl.u32 %v298, 16
        %v383 = vor.u32 %v381, %v379
        %v385 = vshll.u32 %v299, 16
        %v387 = vrot.slane %v385, 1
        %v388 = vsel %vm312, %v383, %v387
        %v389 = vshrl.u32 %v299, 16
        %v391 = vor.u32 %v389, %v387
        %v393 = vshll.u32 %v300, 16
        %v395 = vrot.slane %v393, 1
        %v396 = vsel %vm312, %v391, %v395
        %v397 = vshrl.u32 %v300, 16
        %v399 = vor.u32 %v397, %v395
        %v401 = vshll.u32 %v301, 16
        %v403 = vrot.slane %v401, 1
        %v404 = vsel %vm312, %v399, %v403
        %v405 = vshrl.u32 %v301, 16
        %v407 = vor.u32 %v405, %v403
        %v409 = vshll.u32 %v302, 16
        %v411 = vrot.slane %v409, 1
        %v412 = vsel %vm312, %v407, %v411
        %v413 = vshrl.u32 %v302, 16
        %v415 = vor.u32 %v413, %v411
        %v417 = vshll.u32 %v303, 16
        %v419 = vrot.slane %v417, 1
        %v420 = vsel %vm312, %v415, %v419
        %v421 = vshrl.u32 %v303, 16
        %v423 = vor.u32 %v421, %v419
        %v425 = vshll.u32 %v304, 16
        %v427 = vrot.slane %v425, 1
        %v428 = vsel %vm312, %v423, %v427
        %v429 = vshrl.u32 %v304, 16
        %v431 = vor.u32 %v429, %v427
        %v433 = vshll.u32 %v305, 16
        %v435 = vrot.slane %v433, 1
        %v436 = vsel %vm312, %v431, %v435
        %v437 = vshrl.u32 %v305, 16
        %v439 = vor.u32 %v437, %v435
        %v441 = vshll.u32 %v306, 16
        %v443 = vrot.slane %v441, 1
        %v444 = vsel %vm312, %v439, %v443
        %v445 = vshrl.u32 %v306, 16
        %v447 = vor.u32 %v445, %v443
        %v449 = vshll.u32 %v307, 16
        %v451 = vrot.slane %v449, 1
        %v452 = vsel %vm312, %v447, %v451
        %v453 = vshrl.u32 %v307, 16
        %v455 = vor.u32 %v453, %v451
        %v457 = vshll.u32 %v309, 16
        %v459 = vrot.slane %v457, 1
        %v460 = vsel %vm312, %v455, %v459
        %vm461 = vcmask 31744
        %v463 = vsel %vm461, %v324, 0
        %v466 = vsel %vm461, %v332, 0
        %v469 = vsel %vm461, %v340, 0
        %v472 = vsel %vm461, %v348, 0
        %v475 = vsel %vm461, %v356, 0
        %v478 = vsel %vm461, %v364, 0
        %v481 = vsel %vm461, %v372, 0
        %v484 = vsel %vm461, %v380, 0
        %v487 = vsel %vm461, %v388, 0
        %v490 = vsel %vm461, %v396, 0
        %v493 = vsel %vm461, %v404, 0
        %v496 = vsel %vm461, %v412, 0
        %v499 = vsel %vm461, %v420, 0
        %v502 = vsel %vm461, %v428, 0
        %v505 = vsel %vm461, %v436, 0
        %v508 = vsel %vm461, %v444, 0
        %v511 = vsel %vm461, %v452, 0
        %v514 = vsel %vm461, %v460, 0
        %vm516 = vcmask 1041408
        %v518 = vsel %vm516, %v311, 0
        %520 = vmatpush.bf16.msra.mxu0 0
        %521 = vmatpush.bf16.msra.mxu0 0
        %522 = vmatpush.bf16.msra.mxu0 0
        %523 = vmatpush.bf16.msra.mxu0 0
        %524 = vmatpush.bf16.msra.mxu0 0
        %525 = vmatpush.bf16.msra.mxu0 0
        %526 = vmatpush.bf16.msra.mxu0 0
        %527 = vmatpush.bf16.msra.mxu0 %v518
        %528 = vmatmul.bf16.gmra.mxu0 %v463
        %v529 = vpop.f32.mrf.mxu0
        %v530 = vadd.f32 0.0, %v529
        %v531 = vpop.f32.mrf.mxu0
        %v532 = vadd.f32 0.0, %v531
        %533 = vmatmul.bf16.gmra.mxu0 %v466
        %v534 = vpop.f32.mrf.mxu0
        %v535 = vadd.f32 0.0, %v534
        %v536 = vpop.f32.mrf.mxu0
        %v537 = vadd.f32 0.0, %v536
        %538 = vmatmul.bf16.gmra.mxu0 %v469
        %v539 = vpop.f32.mrf.mxu0
        %v540 = vadd.f32 0.0, %v539
        %v541 = vpop.f32.mrf.mxu0
        %v542 = vadd.f32 0.0, %v541
        %543 = vmatmul.bf16.gmra.mxu0 %v472
        %v544 = vpop.f32.mrf.mxu0
        %v545 = vadd.f32 0.0, %v544
        %v546 = vpop.f32.mrf.mxu0
        %v547 = vadd.f32 0.0, %v546
        %548 = vmatmul.bf16.gmra.mxu0 %v475
        %v549 = vpop.f32.mrf.mxu0
        %v550 = vadd.f32 0.0, %v549
        %v551 = vpop.f32.mrf.mxu0
        %v552 = vadd.f32 0.0, %v551
        %553 = vmatmul.bf16.gmra.mxu0 %v478
        %v554 = vpop.f32.mrf.mxu0
        %v555 = vadd.f32 0.0, %v554
        %v556 = vpop.f32.mrf.mxu0
        %v557 = vadd.f32 0.0, %v556
        %558 = vmatmul.bf16.gmra.mxu0 %v481
        %v559 = vpop.f32.mrf.mxu0
        %v560 = vadd.f32 0.0, %v559
        %v561 = vpop.f32.mrf.mxu0
        %v562 = vadd.f32 0.0, %v561
        %563 = vmatmul.bf16.gmra.mxu0 %v484
        %v564 = vpop.f32.mrf.mxu0
        %v565 = vadd.f32 0.0, %v564
        %v566 = vpop.f32.mrf.mxu0
        %v567 = vadd.f32 0.0, %v566
        %568 = vmatmul.bf16.gmra.mxu0 %v487
        %v569 = vpop.f32.mrf.mxu0
        %v570 = vadd.f32 0.0, %v569
        %v571 = vpop.f32.mrf.mxu0
        %v572 = vadd.f32 0.0, %v571
        %573 = vmatmul.bf16.gmra.mxu0 %v490
        %v574 = vpop.f32.mrf.mxu0
        %v575 = vadd.f32 0.0, %v574
        %v576 = vpop.f32.mrf.mxu0
        %v577 = vadd.f32 0.0, %v576
        %578 = vmatmul.bf16.gmra.mxu0 %v493
        %v579 = vpop.f32.mrf.mxu0
        %v580 = vadd.f32 0.0, %v579
        %v581 = vpop.f32.mrf.mxu0
        %v582 = vadd.f32 0.0, %v581
        %583 = vmatmul.bf16.gmra.mxu0 %v496
        %v584 = vpop.f32.mrf.mxu0
        %v585 = vadd.f32 0.0, %v584
        %v586 = vpop.f32.mrf.mxu0
        %v587 = vadd.f32 0.0, %v586
        %588 = vmatmul.bf16.gmra.mxu0 %v499
        %v589 = vpop.f32.mrf.mxu0
        %v590 = vadd.f32 0.0, %v589
        %v591 = vpop.f32.mrf.mxu0
        %v592 = vadd.f32 0.0, %v591
        %593 = vmatmul.bf16.gmra.mxu0 %v502
        %v594 = vpop.f32.mrf.mxu0
        %v595 = vadd.f32 0.0, %v594
        %v596 = vpop.f32.mrf.mxu0
        %v597 = vadd.f32 0.0, %v596
        %598 = vmatmul.bf16.gmra.mxu0 %v505
        %v599 = vpop.f32.mrf.mxu0
        %v600 = vadd.f32 0.0, %v599
        %v601 = vpop.f32.mrf.mxu0
        %v602 = vadd.f32 0.0, %v601
        %603 = vmatmul.bf16.gmra.mxu0 %v508
        %v604 = vpop.f32.mrf.mxu0
        %v605 = vadd.f32 0.0, %v604
        %v606 = vpop.f32.mrf.mxu0
        %v607 = vadd.f32 0.0, %v606
        %608 = vmatmul.bf16.gmra.mxu0 %v511
        %v609 = vpop.f32.mrf.mxu0
        %v610 = vadd.f32 0.0, %v609
        %v611 = vpop.f32.mrf.mxu0
        %v612 = vadd.f32 0.0, %v611
        %613 = vmatmul.bf16.gmra.mxu0 %v514
        %v614 = vpop.f32.mrf.mxu0
        %v615 = vadd.f32 0.0, %v614
        %v616 = vpop.f32.mrf.mxu0
        %v617 = vadd.f32 0.0, %v616
        %618 = vdwg.mxu0
        %v619 = vsel %vm461, %v290, 0
        %v621 = vsel %vm461, %v291, 0
        %v623 = vsel %vm461, %v292, 0
        %v625 = vsel %vm461, %v293, 0
        %v627 = vsel %vm461, %v294, 0
        %v629 = vsel %vm461, %v295, 0
        %v631 = vsel %vm461, %v296, 0
        %v633 = vsel %vm461, %v297, 0
        %v635 = vsel %vm461, %v298, 0
        %v637 = vsel %vm461, %v299, 0
        %v639 = vsel %vm461, %v300, 0
        %v641 = vsel %vm461, %v301, 0
        %v643 = vsel %vm461, %v302, 0
        %v645 = vsel %vm461, %v303, 0
        %v647 = vsel %vm461, %v304, 0
        %v649 = vsel %vm461, %v305, 0
        %v651 = vsel %vm461, %v306, 0
        %v653 = vsel %vm461, %v307, 0
        %v656 = vsel %vm516, %v308, 0
        %658 = vmatpush.bf16.msra.mxu0 0
        %659 = vmatpush.bf16.msra.mxu0 0
        %660 = vmatpush.bf16.msra.mxu0 0
        %661 = vmatpush.bf16.msra.mxu0 0
        %662 = vmatpush.bf16.msra.mxu0 0
        %663 = vmatpush.bf16.msra.mxu0 0
        %664 = vmatpush.bf16.msra.mxu0 0
        %665 = vmatpush.bf16.msra.mxu0 %v656
        %666 = vmatmul.bf16.gmra.mxu0 %v619
        %v667 = vpop.f32.mrf.mxu0
        %v668 = vadd.f32 %v530, %v667
        %v669 = vpop.f32.mrf.mxu0
        %v670 = vadd.f32 %v532, %v669
        %671 = vmatmul.bf16.gmra.mxu0 %v621
        %v672 = vpop.f32.mrf.mxu0
        %v673 = vadd.f32 %v535, %v672
        %v674 = vpop.f32.mrf.mxu0
        %v675 = vadd.f32 %v537, %v674
        %676 = vmatmul.bf16.gmra.mxu0 %v623
        %v677 = vpop.f32.mrf.mxu0
        %v678 = vadd.f32 %v540, %v677
        %v679 = vpop.f32.mrf.mxu0
        %v680 = vadd.f32 %v542, %v679
        %681 = vmatmul.bf16.gmra.mxu0 %v625
        %v682 = vpop.f32.mrf.mxu0
        %v683 = vadd.f32 %v545, %v682
        %v684 = vpop.f32.mrf.mxu0
        %v685 = vadd.f32 %v547, %v684
        %686 = vmatmul.bf16.gmra.mxu0 %v627
        %v687 = vpop.f32.mrf.mxu0
        %v688 = vadd.f32 %v550, %v687
        %v689 = vpop.f32.mrf.mxu0
        %v690 = vadd.f32 %v552, %v689
        %691 = vmatmul.bf16.gmra.mxu0 %v629
        %v692 = vpop.f32.mrf.mxu0
        %v693 = vadd.f32 %v555, %v692
        %v694 = vpop.f32.mrf.mxu0
        %v695 = vadd.f32 %v557, %v694
        %696 = vmatmul.bf16.gmra.mxu0 %v631
        %v697 = vpop.f32.mrf.mxu0
        %v698 = vadd.f32 %v560, %v697
        %v699 = vpop.f32.mrf.mxu0
        %v700 = vadd.f32 %v562, %v699
        %701 = vmatmul.bf16.gmra.mxu0 %v633
        %v702 = vpop.f32.mrf.mxu0
        %v703 = vadd.f32 %v565, %v702
        %v704 = vpop.f32.mrf.mxu0
        %v705 = vadd.f32 %v567, %v704
        %706 = vmatmul.bf16.gmra.mxu0 %v635
        %v707 = vpop.f32.mrf.mxu0
        %v708 = vadd.f32 %v570, %v707
        %v709 = vpop.f32.mrf.mxu0
        %v710 = vadd.f32 %v572, %v709
        %711 = vmatmul.bf16.gmra.mxu0 %v637
        %v712 = vpop.f32.mrf.mxu0
        %v713 = vadd.f32 %v575, %v712
        %v714 = vpop.f32.mrf.mxu0
        %v715 = vadd.f32 %v577, %v714
        %716 = vmatmul.bf16.gmra.mxu0 %v639
        %v717 = vpop.f32.mrf.mxu0
        %v718 = vadd.f32 %v580, %v717
        %v719 = vpop.f32.mrf.mxu0
        %v720 = vadd.f32 %v582, %v719
        %721 = vmatmul.bf16.gmra.mxu0 %v641
        %v722 = vpop.f32.mrf.mxu0
        %v723 = vadd.f32 %v585, %v722
        %v724 = vpop.f32.mrf.mxu0
        %v725 = vadd.f32 %v587, %v724
        %726 = vmatmul.bf16.gmra.mxu0 %v643
        %v727 = vpop.f32.mrf.mxu0
        %v728 = vadd.f32 %v590, %v727
        %v729 = vpop.f32.mrf.mxu0
        %v730 = vadd.f32 %v592, %v729
        %731 = vmatmul.bf16.gmra.mxu0 %v645
        %v732 = vpop.f32.mrf.mxu0
        %v733 = vadd.f32 %v595, %v732
        %v734 = vpop.f32.mrf.mxu0
        %v735 = vadd.f32 %v597, %v734
        %736 = vmatmul.bf16.gmra.mxu0 %v647
        %v737 = vpop.f32.mrf.mxu0
        %v738 = vadd.f32 %v600, %v737
        %v739 = vpop.f32.mrf.mxu0
        %v740 = vadd.f32 %v602, %v739
        %741 = vmatmul.bf16.gmra.mxu0 %v649
        %v742 = vpop.f32.mrf.mxu0
        %v743 = vadd.f32 %v605, %v742
        %v744 = vpop.f32.mrf.mxu0
        %v745 = vadd.f32 %v607, %v744
        %746 = vmatmul.bf16.gmra.mxu0 %v651
        %v747 = vpop.f32.mrf.mxu0
        %v748 = vadd.f32 %v610, %v747
        %v749 = vpop.f32.mrf.mxu0
        %v750 = vadd.f32 %v612, %v749
        %751 = vmatmul.bf16.gmra.mxu0 %v653
        %v752 = vpop.f32.mrf.mxu0
        %v753 = vadd.f32 %v615, %v752
        %v754 = vpop.f32.mrf.mxu0
        %v755 = vadd.f32 %v617, %v754
        %756 = vdwg.mxu0
        %s757 = scalar_lea.vmem %s1, 4
        %v758 = vld [vmem:[%s757] sm:$0x3]
        %vm778 = vcmask 1046528
        %v779 = vrot.slane %v290, 1
        %v780 = vrot.slane %v291, 1
        %v781 = vsel %vm778, %v779, %v780
        %v782 = vrot.slane %v292, 1
        %v783 = vsel %vm778, %v780, %v782
        %v784 = vrot.slane %v293, 1
        %v785 = vsel %vm778, %v782, %v784
        %v786 = vrot.slane %v294, 1
        %v787 = vsel %vm778, %v784, %v786
        %v788 = vrot.slane %v295, 1
        %v789 = vsel %vm778, %v786, %v788
        %v790 = vrot.slane %v296, 1
        %v791 = vsel %vm778, %v788, %v790
        %v792 = vrot.slane %v297, 1
        %v793 = vsel %vm778, %v790, %v792
        %v794 = vrot.slane %v298, 1
        %v795 = vsel %vm778, %v792, %v794
        %v796 = vrot.slane %v299, 1
        %v797 = vsel %vm778, %v794, %v796
        %v798 = vrot.slane %v300, 1
        %v799 = vsel %vm778, %v796, %v798
        %v800 = vrot.slane %v301, 1
        %v801 = vsel %vm778, %v798, %v800
        %v802 = vrot.slane %v302, 1
        %v803 = vsel %vm778, %v800, %v802
        %v804 = vrot.slane %v303, 1
        %v805 = vsel %vm778, %v802, %v804
        %v806 = vrot.slane %v304, 1
        %v807 = vsel %vm778, %v804, %v806
        %v808 = vrot.slane %v305, 1
        %v809 = vsel %vm778, %v806, %v808
        %v810 = vrot.slane %v306, 1
        %v811 = vsel %vm778, %v808, %v810
        %v812 = vrot.slane %v307, 1
        %v813 = vsel %vm778, %v810, %v812
        %v814 = vrot.slane %v309, 1
        %v815 = vsel %vm778, %v812, %v814
        %v817 = vsel %vm461, %v781, 0
        %v820 = vsel %vm461, %v783, 0
        %v823 = vsel %vm461, %v785, 0
        %v826 = vsel %vm461, %v787, 0
        %v829 = vsel %vm461, %v789, 0
        %v832 = vsel %vm461, %v791, 0
        %v835 = vsel %vm461, %v793, 0
        %v838 = vsel %vm461, %v795, 0
        %v841 = vsel %vm461, %v797, 0
        %v844 = vsel %vm461, %v799, 0
        %v847 = vsel %vm461, %v801, 0
        %v850 = vsel %vm461, %v803, 0
        %v853 = vsel %vm461, %v805, 0
        %v856 = vsel %vm461, %v807, 0
        %v859 = vsel %vm461, %v809, 0
        %v862 = vsel %vm461, %v811, 0
        %v865 = vsel %vm461, %v813, 0
        %v868 = vsel %vm461, %v815, 0
        %v871 = vsel %vm516, %v758, 0
        %873 = vmatpush.bf16.msra.mxu0 0
        %874 = vmatpush.bf16.msra.mxu0 0
        %875 = vmatpush.bf16.msra.mxu0 0
        %876 = vmatpush.bf16.msra.mxu0 0
        %877 = vmatpush.bf16.msra.mxu0 0
        %878 = vmatpush.bf16.msra.mxu0 0
        %879 = vmatpush.bf16.msra.mxu0 0
        %880 = vmatpush.bf16.msra.mxu0 %v871
        %881 = vmatmul.bf16.gmra.mxu0 %v817
        %v882 = vpop.f32.mrf.mxu0
        %v883 = vadd.f32 0.0, %v882
        %v884 = vpop.f32.mrf.mxu0
        %v885 = vadd.f32 0.0, %v884
        %886 = vmatmul.bf16.gmra.mxu0 %v820
        %v887 = vpop.f32.mrf.mxu0
        %v888 = vadd.f32 0.0, %v887
        %v889 = vpop.f32.mrf.mxu0
        %v890 = vadd.f32 0.0, %v889
        %891 = vmatmul.bf16.gmra.mxu0 %v823
        %v892 = vpop.f32.mrf.mxu0
        %v893 = vadd.f32 0.0, %v892
        %v894 = vpop.f32.mrf.mxu0
        %v895 = vadd.f32 0.0, %v894
        %896 = vmatmul.bf16.gmra.mxu0 %v826
        %v897 = vpop.f32.mrf.mxu0
        %v898 = vadd.f32 0.0, %v897
        %v899 = vpop.f32.mrf.mxu0
        %v900 = vadd.f32 0.0, %v899
        %901 = vmatmul.bf16.gmra.mxu0 %v829
        %v902 = vpop.f32.mrf.mxu0
        %v903 = vadd.f32 0.0, %v902
        %v904 = vpop.f32.mrf.mxu0
        %v905 = vadd.f32 0.0, %v904
        %906 = vmatmul.bf16.gmra.mxu0 %v832
        %v907 = vpop.f32.mrf.mxu0
        %v908 = vadd.f32 0.0, %v907
        %v909 = vpop.f32.mrf.mxu0
        %v910 = vadd.f32 0.0, %v909
        %911 = vmatmul.bf16.gmra.mxu0 %v835
        %v912 = vpop.f32.mrf.mxu0
        %v913 = vadd.f32 0.0, %v912
        %v914 = vpop.f32.mrf.mxu0
        %v915 = vadd.f32 0.0, %v914
        %916 = vmatmul.bf16.gmra.mxu0 %v838
        %v917 = vpop.f32.mrf.mxu0
        %v918 = vadd.f32 0.0, %v917
        %v919 = vpop.f32.mrf.mxu0
        %v920 = vadd.f32 0.0, %v919
        %921 = vmatmul.bf16.gmra.mxu0 %v841
        %v922 = vpop.f32.mrf.mxu0
        %v923 = vadd.f32 0.0, %v922
        %v924 = vpop.f32.mrf.mxu0
        %v925 = vadd.f32 0.0, %v924
        %926 = vmatmul.bf16.gmra.mxu0 %v844
        %v927 = vpop.f32.mrf.mxu0
        %v928 = vadd.f32 0.0, %v927
        %v929 = vpop.f32.mrf.mxu0
        %v930 = vadd.f32 0.0, %v929
        %931 = vmatmul.bf16.gmra.mxu0 %v847
        %v932 = vpop.f32.mrf.mxu0
        %v933 = vadd.f32 0.0, %v932
        %v934 = vpop.f32.mrf.mxu0
        %v935 = vadd.f32 0.0, %v934
        %936 = vmatmul.bf16.gmra.mxu0 %v850
        %v937 = vpop.f32.mrf.mxu0
        %v938 = vadd.f32 0.0, %v937
        %v939 = vpop.f32.mrf.mxu0
        %v940 = vadd.f32 0.0, %v939
        %941 = vmatmul.bf16.gmra.mxu0 %v853
        %v942 = vpop.f32.mrf.mxu0
        %v943 = vadd.f32 0.0, %v942
        %v944 = vpop.f32.mrf.mxu0
        %v945 = vadd.f32 0.0, %v944
        %946 = vmatmul.bf16.gmra.mxu0 %v856
        %v947 = vpop.f32.mrf.mxu0
        %v948 = vadd.f32 0.0, %v947
        %v949 = vpop.f32.mrf.mxu0
        %v950 = vadd.f32 0.0, %v949
        %951 = vmatmul.bf16.gmra.mxu0 %v859
        %v952 = vpop.f32.mrf.mxu0
        %v953 = vadd.f32 0.0, %v952
        %v954 = vpop.f32.mrf.mxu0
        %v955 = vadd.f32 0.0, %v954
        %956 = vmatmul.bf16.gmra.mxu0 %v862
        %v957 = vpop.f32.mrf.mxu0
        %v958 = vadd.f32 0.0, %v957
        %v959 = vpop.f32.mrf.mxu0
        %v960 = vadd.f32 0.0, %v959
        %961 = vmatmul.bf16.gmra.mxu0 %v865
        %v962 = vpop.f32.mrf.mxu0
        %v963 = vadd.f32 0.0, %v962
        %v964 = vpop.f32.mrf.mxu0
        %v965 = vadd.f32 0.0, %v964
        %966 = vmatmul.bf16.gmra.mxu0 %v868
        %v967 = vpop.f32.mrf.mxu0
        %v968 = vadd.f32 0.0, %v967
        %v969 = vpop.f32.mrf.mxu0
        %v970 = vadd.f32 0.0, %v969
        %971 = vdwg.mxu0
        %v972 = vadd.f32 %v668, %v883
        %v973 = vadd.f32 %v670, %v885
        %v974 = vadd.f32 %v673, %v888
        %v975 = vadd.f32 %v675, %v890
        %v976 = vadd.f32 %v678, %v893
        %v977 = vadd.f32 %v680, %v895
        %v978 = vadd.f32 %v683, %v898
        %v979 = vadd.f32 %v685, %v900
        %v980 = vadd.f32 %v688, %v903
        %v981 = vadd.f32 %v690, %v905
        %v982 = vadd.f32 %v693, %v908
        %v983 = vadd.f32 %v695, %v910
        %v984 = vadd.f32 %v698, %v913
        %v985 = vadd.f32 %v700, %v915
        %v986 = vadd.f32 %v703, %v918
        %v987 = vadd.f32 %v705, %v920
        %v988 = vadd.f32 %v708, %v923
        %v989 = vadd.f32 %v710, %v925
        %v990 = vadd.f32 %v713, %v928
        %v991 = vadd.f32 %v715, %v930
        %v992 = vadd.f32 %v718, %v933
        %v993 = vadd.f32 %v720, %v935
        %v994 = vadd.f32 %v723, %v938
        %v995 = vadd.f32 %v725, %v940
        %v996 = vadd.f32 %v728, %v943
        %v997 = vadd.f32 %v730, %v945
        %v998 = vadd.f32 %v733, %v948
        %v999 = vadd.f32 %v735, %v950
        %v1000 = vadd.f32 %v738, %v953
        %v1001 = vadd.f32 %v740, %v955
        %v1002 = vadd.f32 %v743, %v958
        %v1003 = vadd.f32 %v745, %v960
        %v1004 = vadd.f32 %v748, %v963
        %v1005 = vadd.f32 %v750, %v965
        %v1006 = vadd.f32 %v753, %v968
        %v1007 = vadd.f32 %v755, %v970
        %v1008 = vpack.c.bf16 %v286, %v285
        %v1009 = vpack.c.bf16 %v287, %v287
        %s1010 = scalar_lea.vmem %s1, 6
        %v1011 = vld [vmem:[%s1010] sm:$0x3]
        %v1014 = vrot.slane %v1008, 1
        %v1015 = vsel %vm778, %v812, %v1014
        %v1016 = vrot.slane %v1009, 1
        %v1017 = vsel %vm778, %v1014, %v1016
        %v1019 = vsel %vm461, %v1015, 0
        %v1022 = vsel %vm461, %v1017, 0
        %v1025 = vsel %vm516, %v1011, 0
        %1027 = vmatpush.bf16.msra.mxu0 0
        %1028 = vmatpush.bf16.msra.mxu0 0
        %1029 = vmatpush.bf16.msra.mxu0 0
        %1030 = vmatpush.bf16.msra.mxu0 0
        %1031 = vmatpush.bf16.msra.mxu0 0
        %1032 = vmatpush.bf16.msra.mxu0 0
        %1033 = vmatpush.bf16.msra.mxu0 0
        %1034 = vmatpush.bf16.msra.mxu0 %v1025
        %1035 = vmatmul.bf16.gmra.mxu0 %v820
        %v1036 = vpop.f32.mrf.mxu0
        %v1037 = vadd.f32 0.0, %v1036
        %v1038 = vpop.f32.mrf.mxu0
        %v1039 = vadd.f32 0.0, %v1038
        %1040 = vmatmul.bf16.gmra.mxu0 %v823
        %v1041 = vpop.f32.mrf.mxu0
        %v1042 = vadd.f32 0.0, %v1041
        %v1043 = vpop.f32.mrf.mxu0
        %v1044 = vadd.f32 0.0, %v1043
        %1045 = vmatmul.bf16.gmra.mxu0 %v826
        %v1046 = vpop.f32.mrf.mxu0
        %v1047 = vadd.f32 0.0, %v1046
        %v1048 = vpop.f32.mrf.mxu0
        %v1049 = vadd.f32 0.0, %v1048
        %1050 = vmatmul.bf16.gmra.mxu0 %v829
        %v1051 = vpop.f32.mrf.mxu0
        %v1052 = vadd.f32 0.0, %v1051
        %v1053 = vpop.f32.mrf.mxu0
        %v1054 = vadd.f32 0.0, %v1053
        %1055 = vmatmul.bf16.gmra.mxu0 %v832
        %v1056 = vpop.f32.mrf.mxu0
        %v1057 = vadd.f32 0.0, %v1056
        %v1058 = vpop.f32.mrf.mxu0
        %v1059 = vadd.f32 0.0, %v1058
        %1060 = vmatmul.bf16.gmra.mxu0 %v835
        %v1061 = vpop.f32.mrf.mxu0
        %v1062 = vadd.f32 0.0, %v1061
        %v1063 = vpop.f32.mrf.mxu0
        %v1064 = vadd.f32 0.0, %v1063
        %1065 = vmatmul.bf16.gmra.mxu0 %v838
        %v1066 = vpop.f32.mrf.mxu0
        %v1067 = vadd.f32 0.0, %v1066
        %v1068 = vpop.f32.mrf.mxu0
        %v1069 = vadd.f32 0.0, %v1068
        %1070 = vmatmul.bf16.gmra.mxu0 %v841
        %v1071 = vpop.f32.mrf.mxu0
        %v1072 = vadd.f32 0.0, %v1071
        %v1073 = vpop.f32.mrf.mxu0
        %v1074 = vadd.f32 0.0, %v1073
        %1075 = vmatmul.bf16.gmra.mxu0 %v844
        %v1076 = vpop.f32.mrf.mxu0
        %v1077 = vadd.f32 0.0, %v1076
        %v1078 = vpop.f32.mrf.mxu0
        %v1079 = vadd.f32 0.0, %v1078
        %1080 = vmatmul.bf16.gmra.mxu0 %v847
        %v1081 = vpop.f32.mrf.mxu0
        %v1082 = vadd.f32 0.0, %v1081
        %v1083 = vpop.f32.mrf.mxu0
        %v1084 = vadd.f32 0.0, %v1083
        %1085 = vmatmul.bf16.gmra.mxu0 %v850
        %v1086 = vpop.f32.mrf.mxu0
        %v1087 = vadd.f32 0.0, %v1086
        %v1088 = vpop.f32.mrf.mxu0
        %v1089 = vadd.f32 0.0, %v1088
        %1090 = vmatmul.bf16.gmra.mxu0 %v853
        %v1091 = vpop.f32.mrf.mxu0
        %v1092 = vadd.f32 0.0, %v1091
        %v1093 = vpop.f32.mrf.mxu0
        %v1094 = vadd.f32 0.0, %v1093
        %1095 = vmatmul.bf16.gmra.mxu0 %v856
        %v1096 = vpop.f32.mrf.mxu0
        %v1097 = vadd.f32 0.0, %v1096
        %v1098 = vpop.f32.mrf.mxu0
        %v1099 = vadd.f32 0.0, %v1098
        %1100 = vmatmul.bf16.gmra.mxu0 %v859
        %v1101 = vpop.f32.mrf.mxu0
        %v1102 = vadd.f32 0.0, %v1101
        %v1103 = vpop.f32.mrf.mxu0
        %v1104 = vadd.f32 0.0, %v1103
        %1105 = vmatmul.bf16.gmra.mxu0 %v862
        %v1106 = vpop.f32.mrf.mxu0
        %v1107 = vadd.f32 0.0, %v1106
        %v1108 = vpop.f32.mrf.mxu0
        %v1109 = vadd.f32 0.0, %v1108
        %1110 = vmatmul.bf16.gmra.mxu0 %v865
        %v1111 = vpop.f32.mrf.mxu0
        %v1112 = vadd.f32 0.0, %v1111
        %v1113 = vpop.f32.mrf.mxu0
        %v1114 = vadd.f32 0.0, %v1113
        %1115 = vmatmul.bf16.gmra.mxu0 %v1019
        %v1116 = vpop.f32.mrf.mxu0
        %v1117 = vadd.f32 0.0, %v1116
        %v1118 = vpop.f32.mrf.mxu0
        %v1119 = vadd.f32 0.0, %v1118
        %1120 = vmatmul.bf16.gmra.mxu0 %v1022
        %v1121 = vpop.f32.mrf.mxu0
        %v1122 = vadd.f32 0.0, %v1121
        %v1123 = vpop.f32.mrf.mxu0
        %v1124 = vadd.f32 0.0, %v1123
        %1125 = vdwg.mxu0
        %v1126 = vadd.f32 %v972, %v1037
        %v1127 = vadd.f32 %v973, %v1039
        %v1128 = vadd.f32 %v974, %v1042
        %v1129 = vadd.f32 %v975, %v1044
        %v1130 = vadd.f32 %v976, %v1047
        %v1131 = vadd.f32 %v977, %v1049
        %v1132 = vadd.f32 %v978, %v1052
        %v1133 = vadd.f32 %v979, %v1054
        %v1134 = vadd.f32 %v980, %v1057
        %v1135 = vadd.f32 %v981, %v1059
        %v1136 = vadd.f32 %v982, %v1062
        %v1137 = vadd.f32 %v983, %v1064
        %v1138 = vadd.f32 %v984, %v1067
        %v1139 = vadd.f32 %v985, %v1069
        %v1140 = vadd.f32 %v986, %v1072
        %v1141 = vadd.f32 %v987, %v1074
        %v1142 = vadd.f32 %v988, %v1077
        %v1143 = vadd.f32 %v989, %v1079
        %v1144 = vadd.f32 %v990, %v1082
        %v1145 = vadd.f32 %v991, %v1084
        %v1146 = vadd.f32 %v992, %v1087
        %v1147 = vadd.f32 %v993, %v1089
        %v1148 = vadd.f32 %v994, %v1092
        %v1149 = vadd.f32 %v995, %v1094
        %v1150 = vadd.f32 %v996, %v1097
        %v1151 = vadd.f32 %v997, %v1099
        %v1152 = vadd.f32 %v998, %v1102
        %v1153 = vadd.f32 %v999, %v1104
        %v1154 = vadd.f32 %v1000, %v1107
        %v1155 = vadd.f32 %v1001, %v1109
        %v1156 = vadd.f32 %v1002, %v1112
        %v1157 = vadd.f32 %v1003, %v1114
        %v1158 = vadd.f32 %v1004, %v1117
        %v1159 = vadd.f32 %v1005, %v1119
        %v1160 = vadd.f32 %v1006, %v1122
        %v1161 = vadd.f32 %v1007, %v1124
        %s1162 = scalar_lea.vmem %s1, 8
        %v1163 = vld [vmem:[%s1162] sm:$0x3]
        %vm1164 = vsmask.f32 6400
        %v1165 = vrot.slane %v325, 1
        %v1166 = vrot.slane %v321, 2
        %v1167 = vor.u32 %v1165, %v1166
        %v1168 = vrot.slane %v333, 1
        %v1169 = vrot.slane %v329, 2
        %v1170 = vor.u32 %v1168, %v1169
        %v1171 = vsel %vm1164, %v1167, %v1170
        %v1172 = vrot.slane %v341, 1
        %v1173 = vrot.slane %v337, 2
        %v1174 = vor.u32 %v1172, %v1173
        %v1175 = vsel %vm1164, %v1170, %v1174
        %v1176 = vrot.slane %v349, 1
        %v1177 = vrot.slane %v345, 2
        %v1178 = vor.u32 %v1176, %v1177
        %v1179 = vsel %vm1164, %v1174, %v1178
        %v1180 = vrot.slane %v357, 1
        %v1181 = vrot.slane %v353, 2
        %v1182 = vor.u32 %v1180, %v1181
        %v1183 = vsel %vm1164, %v1178, %v1182
        %v1184 = vrot.slane %v365, 1
        %v1185 = vrot.slane %v361, 2
        %v1186 = vor.u32 %v1184, %v1185
        %v1187 = vsel %vm1164, %v1182, %v1186
        %v1188 = vrot.slane %v373, 1
        %v1189 = vrot.slane %v369, 2
        %v1190 = vor.u32 %v1188, %v1189
        %v1191 = vsel %vm1164, %v1186, %v1190
        %v1192 = vrot.slane %v381, 1
        %v1193 = vrot.slane %v377, 2
        %v1194 = vor.u32 %v1192, %v1193
        %v1195 = vsel %vm1164, %v1190, %v1194
        %v1196 = vrot.slane %v389, 1
        %v1197 = vrot.slane %v385, 2
        %v1198 = vor.u32 %v1196, %v1197
        %v1199 = vsel %vm1164, %v1194, %v1198
        %v1200 = vrot.slane %v397, 1
        %v1201 = vrot.slane %v393, 2
        %v1202 = vor.u32 %v1200, %v1201
        %v1203 = vsel %vm1164, %v1198, %v1202
        %v1204 = vrot.slane %v405, 1
        %v1205 = vrot.slane %v401, 2
        %v1206 = vor.u32 %v1204, %v1205
        %v1207 = vsel %vm1164, %v1202, %v1206
        %v1208 = vrot.slane %v413, 1
        %v1209 = vrot.slane %v409, 2
        %v1210 = vor.u32 %v1208, %v1209
        %v1211 = vsel %vm1164, %v1206, %v1210
        %v1212 = vrot.slane %v421, 1
        %v1213 = vrot.slane %v417, 2
        %v1214 = vor.u32 %v1212, %v1213
        %v1215 = vsel %vm1164, %v1210, %v1214
        %v1216 = vrot.slane %v429, 1
        %v1217 = vrot.slane %v425, 2
        %v1218 = vor.u32 %v1216, %v1217
        %v1219 = vsel %vm1164, %v1214, %v1218
        %v1220 = vrot.slane %v437, 1
        %v1221 = vrot.slane %v433, 2
        %v1222 = vor.u32 %v1220, %v1221
        %v1223 = vsel %vm1164, %v1218, %v1222
        %v1224 = vrot.slane %v445, 1
        %v1225 = vrot.slane %v441, 2
        %v1226 = vor.u32 %v1224, %v1225
        %v1227 = vsel %vm1164, %v1222, %v1226
        %v1228 = vrot.slane %v453, 1
        %v1229 = vrot.slane %v449, 2
        %v1230 = vor.u32 %v1228, %v1229
        %v1231 = vsel %vm1164, %v1226, %v1230
        %v1233 = vshrl.u32 %v1008, 16
        %v1235 = vrot.slane %v1233, 1
        %v1236 = vshll.u32 %v1008, 16
        %v1238 = vrot.slane %v1236, 2
        %v1239 = vor.u32 %v1235, %v1238
        %v1240 = vsel %vm1164, %v1230, %v1239
        %v1242 = vshrl.u32 %v1009, 16
        %v1244 = vrot.slane %v1242, 1
        %v1245 = vshll.u32 %v1009, 16
        %v1247 = vrot.slane %v1245, 2
        %v1248 = vor.u32 %v1244, %v1247
        %v1249 = vsel %vm1164, %v1239, %v1248
        %v1251 = vsel %vm461, %v1171, 0
        %v1254 = vsel %vm461, %v1175, 0
        %v1257 = vsel %vm461, %v1179, 0
        %v1260 = vsel %vm461, %v1183, 0
        %v1263 = vsel %vm461, %v1187, 0
        %v1266 = vsel %vm461, %v1191, 0
        %v1269 = vsel %vm461, %v1195, 0
        %v1272 = vsel %vm461, %v1199, 0
        %v1275 = vsel %vm461, %v1203, 0
        %v1278 = vsel %vm461, %v1207, 0
        %v1281 = vsel %vm461, %v1211, 0
        %v1284 = vsel %vm461, %v1215, 0
        %v1287 = vsel %vm461, %v1219, 0
        %v1290 = vsel %vm461, %v1223, 0
        %v1293 = vsel %vm461, %v1227, 0
        %v1296 = vsel %vm461, %v1231, 0
        %v1299 = vsel %vm461, %v1240, 0
        %v1302 = vsel %vm461, %v1249, 0
        %v1305 = vsel %vm516, %v1163, 0
        %1307 = vmatpush.bf16.msra.mxu0 0
        %1308 = vmatpush.bf16.msra.mxu0 0
        %1309 = vmatpush.bf16.msra.mxu0 0
        %1310 = vmatpush.bf16.msra.mxu0 0
        %1311 = vmatpush.bf16.msra.mxu0 0
        %1312 = vmatpush.bf16.msra.mxu0 0
        %1313 = vmatpush.bf16.msra.mxu0 0
        %1314 = vmatpush.bf16.msra.mxu0 %v1305
        %1315 = vmatmul.bf16.gmra.mxu0 %v1251
        %v1316 = vpop.f32.mrf.mxu0
        %v1317 = vadd.f32 0.0, %v1316
        %v1318 = vpop.f32.mrf.mxu0
        %v1319 = vadd.f32 0.0, %v1318
        %1320 = vmatmul.bf16.gmra.mxu0 %v1254
        %v1321 = vpop.f32.mrf.mxu0
        %v1322 = vadd.f32 0.0, %v1321
        %v1323 = vpop.f32.mrf.mxu0
        %v1324 = vadd.f32 0.0, %v1323
        %1325 = vmatmul.bf16.gmra.mxu0 %v1257
        %v1326 = vpop.f32.mrf.mxu0
        %v1327 = vadd.f32 0.0, %v1326
        %v1328 = vpop.f32.mrf.mxu0
        %v1329 = vadd.f32 0.0, %v1328
        %1330 = vmatmul.bf16.gmra.mxu0 %v1260
        %v1331 = vpop.f32.mrf.mxu0
        %v1332 = vadd.f32 0.0, %v1331
        %v1333 = vpop.f32.mrf.mxu0
        %v1334 = vadd.f32 0.0, %v1333
        %1335 = vmatmul.bf16.gmra.mxu0 %v1263
        %v1336 = vpop.f32.mrf.mxu0
        %v1337 = vadd.f32 0.0, %v1336
        %v1338 = vpop.f32.mrf.mxu0
        %v1339 = vadd.f32 0.0, %v1338
        %1340 = vmatmul.bf16.gmra.mxu0 %v1266
        %v1341 = vpop.f32.mrf.mxu0
        %v1342 = vadd.f32 0.0, %v1341
        %v1343 = vpop.f32.mrf.mxu0
        %v1344 = vadd.f32 0.0, %v1343
        %1345 = vmatmul.bf16.gmra.mxu0 %v1269
        %v1346 = vpop.f32.mrf.mxu0
        %v1347 = vadd.f32 0.0, %v1346
        %v1348 = vpop.f32.mrf.mxu0
        %v1349 = vadd.f32 0.0, %v1348
        %1350 = vmatmul.bf16.gmra.mxu0 %v1272
        %v1351 = vpop.f32.mrf.mxu0
        %v1352 = vadd.f32 0.0, %v1351
        %v1353 = vpop.f32.mrf.mxu0
        %v1354 = vadd.f32 0.0, %v1353
        %1355 = vmatmul.bf16.gmra.mxu0 %v1275
        %v1356 = vpop.f32.mrf.mxu0
        %v1357 = vadd.f32 0.0, %v1356
        %v1358 = vpop.f32.mrf.mxu0
        %v1359 = vadd.f32 0.0, %v1358
        %1360 = vmatmul.bf16.gmra.mxu0 %v1278
        %v1361 = vpop.f32.mrf.mxu0
        %v1362 = vadd.f32 0.0, %v1361
        %v1363 = vpop.f32.mrf.mxu0
        %v1364 = vadd.f32 0.0, %v1363
        %1365 = vmatmul.bf16.gmra.mxu0 %v1281
        %v1366 = vpop.f32.mrf.mxu0
        %v1367 = vadd.f32 0.0, %v1366
        %v1368 = vpop.f32.mrf.mxu0
        %v1369 = vadd.f32 0.0, %v1368
        %1370 = vmatmul.bf16.gmra.mxu0 %v1284
        %v1371 = vpop.f32.mrf.mxu0
        %v1372 = vadd.f32 0.0, %v1371
        %v1373 = vpop.f32.mrf.mxu0
        %v1374 = vadd.f32 0.0, %v1373
        %1375 = vmatmul.bf16.gmra.mxu0 %v1287
        %v1376 = vpop.f32.mrf.mxu0
        %v1377 = vadd.f32 0.0, %v1376
        %v1378 = vpop.f32.mrf.mxu0
        %v1379 = vadd.f32 0.0, %v1378
        %1380 = vmatmul.bf16.gmra.mxu0 %v1290
        %v1381 = vpop.f32.mrf.mxu0
        %v1382 = vadd.f32 0.0, %v1381
        %v1383 = vpop.f32.mrf.mxu0
        %v1384 = vadd.f32 0.0, %v1383
        %1385 = vmatmul.bf16.gmra.mxu0 %v1293
        %v1386 = vpop.f32.mrf.mxu0
        %v1387 = vadd.f32 0.0, %v1386
        %v1388 = vpop.f32.mrf.mxu0
        %v1389 = vadd.f32 0.0, %v1388
        %1390 = vmatmul.bf16.gmra.mxu0 %v1296
        %v1391 = vpop.f32.mrf.mxu0
        %v1392 = vadd.f32 0.0, %v1391
        %v1393 = vpop.f32.mrf.mxu0
        %v1394 = vadd.f32 0.0, %v1393
        %1395 = vmatmul.bf16.gmra.mxu0 %v1299
        %v1396 = vpop.f32.mrf.mxu0
        %v1397 = vadd.f32 0.0, %v1396
        %v1398 = vpop.f32.mrf.mxu0
        %v1399 = vadd.f32 0.0, %v1398
        %1400 = vmatmul.bf16.gmra.mxu0 %v1302
        %v1401 = vpop.f32.mrf.mxu0
        %v1402 = vadd.f32 0.0, %v1401
        %v1403 = vpop.f32.mrf.mxu0
        %v1404 = vadd.f32 0.0, %v1403
        %1405 = vdwg.mxu0
        %v1406 = vadd.f32 %v1126, %v1317
        %v1407 = vadd.f32 %v1127, %v1319
        %v1408 = vadd.f32 %v1128, %v1322
        %v1409 = vadd.f32 %v1129, %v1324
        %v1410 = vadd.f32 %v1130, %v1327
        %v1411 = vadd.f32 %v1131, %v1329
        %v1412 = vadd.f32 %v1132, %v1332
        %v1413 = vadd.f32 %v1133, %v1334
        %v1414 = vadd.f32 %v1134, %v1337
        %v1415 = vadd.f32 %v1135, %v1339
        %v1416 = vadd.f32 %v1136, %v1342
        %v1417 = vadd.f32 %v1137, %v1344
        %v1418 = vadd.f32 %v1138, %v1347
        %v1419 = vadd.f32 %v1139, %v1349
        %v1420 = vadd.f32 %v1140, %v1352
        %v1421 = vadd.f32 %v1141, %v1354
        %v1422 = vadd.f32 %v1142, %v1357
        %v1423 = vadd.f32 %v1143, %v1359
        %v1424 = vadd.f32 %v1144, %v1362
        %v1425 = vadd.f32 %v1145, %v1364
        %v1426 = vadd.f32 %v1146, %v1367
        %v1427 = vadd.f32 %v1147, %v1369
        %v1428 = vadd.f32 %v1148, %v1372
        %v1429 = vadd.f32 %v1149, %v1374
        %v1430 = vadd.f32 %v1150, %v1377
        %v1431 = vadd.f32 %v1151, %v1379
        %v1432 = vadd.f32 %v1152, %v1382
        %v1433 = vadd.f32 %v1153, %v1384
        %v1434 = vadd.f32 %v1154, %v1387
        %v1435 = vadd.f32 %v1155, %v1389
        %v1436 = vadd.f32 %v1156, %v1392
        %v1437 = vadd.f32 %v1157, %v1394
        %v1438 = vadd.f32 %v1158, %v1397
        %v1439 = vadd.f32 %v1159, %v1399
        %v1440 = vadd.f32 %v1160, %v1402
        %v1441 = vadd.f32 %v1161, %v1404
        %s1442 = scalar_lea.vmem %s1, 10
        %v1443 = vld [vmem:[%s1442] sm:$0x3]
        %vm1444 = vcmask 1045504
        %v1445 = vrot.slane %v291, 2
        %v1446 = vrot.slane %v292, 2
        %v1447 = vsel %vm1444, %v1445, %v1446
        %v1448 = vrot.slane %v293, 2
        %v1449 = vsel %vm1444, %v1446, %v1448
        %v1450 = vrot.slane %v294, 2
        %v1451 = vsel %vm1444, %v1448, %v1450
        %v1452 = vrot.slane %v295, 2
        %v1453 = vsel %vm1444, %v1450, %v1452
        %v1454 = vrot.slane %v296, 2
        %v1455 = vsel %vm1444, %v1452, %v1454
        %v1456 = vrot.slane %v297, 2
        %v1457 = vsel %vm1444, %v1454, %v1456
        %v1458 = vrot.slane %v298, 2
        %v1459 = vsel %vm1444, %v1456, %v1458
        %v1460 = vrot.slane %v299, 2
        %v1461 = vsel %vm1444, %v1458, %v1460
        %v1462 = vrot.slane %v300, 2
        %v1463 = vsel %vm1444, %v1460, %v1462
        %v1464 = vrot.slane %v301, 2
        %v1465 = vsel %vm1444, %v1462, %v1464
        %v1466 = vrot.slane %v302, 2
        %v1467 = vsel %vm1444, %v1464, %v1466
        %v1468 = vrot.slane %v303, 2
        %v1469 = vsel %vm1444, %v1466, %v1468
        %v1470 = vrot.slane %v304, 2
        %v1471 = vsel %vm1444, %v1468, %v1470
        %v1472 = vrot.slane %v305, 2
        %v1473 = vsel %vm1444, %v1470, %v1472
        %v1474 = vrot.slane %v306, 2
        %v1475 = vsel %vm1444, %v1472, %v1474
        %v1476 = vrot.slane %v307, 2
        %v1477 = vsel %vm1444, %v1474, %v1476
        %v1478 = vrot.slane %v1008, 2
        %v1479 = vsel %vm1444, %v1476, %v1478
        %v1480 = vrot.slane %v1009, 2
        %v1481 = vsel %vm1444, %v1478, %v1480
        %v1483 = vsel %vm461, %v1447, 0
        %v1486 = vsel %vm461, %v1449, 0
        %v1489 = vsel %vm461, %v1451, 0
        %v1492 = vsel %vm461, %v1453, 0
        %v1495 = vsel %vm461, %v1455, 0
        %v1498 = vsel %vm461, %v1457, 0
        %v1501 = vsel %vm461, %v1459, 0
        %v1504 = vsel %vm461, %v1461, 0
        %v1507 = vsel %vm461, %v1463, 0
        %v1510 = vsel %vm461, %v1465, 0
        %v1513 = vsel %vm461, %v1467, 0
        %v1516 = vsel %vm461, %v1469, 0
        %v1519 = vsel %vm461, %v1471, 0
        %v1522 = vsel %vm461, %v1473, 0
        %v1525 = vsel %vm461, %v1475, 0
        %v1528 = vsel %vm461, %v1477, 0
        %v1531 = vsel %vm461, %v1479, 0
        %v1534 = vsel %vm461, %v1481, 0
        %v1537 = vsel %vm516, %v1443, 0
        %1539 = vmatpush.bf16.msra.mxu0 0
        %1540 = vmatpush.bf16.msra.mxu0 0
        %1541 = vmatpush.bf16.msra.mxu0 0
        %1542 = vmatpush.bf16.msra.mxu0 0
        %1543 = vmatpush.bf16.msra.mxu0 0
        %1544 = vmatpush.bf16.msra.mxu0 0
        %1545 = vmatpush.bf16.msra.mxu0 0
        %1546 = vmatpush.bf16.msra.mxu0 %v1537
        %1547 = vmatmul.bf16.gmra.mxu0 %v1483
        %v1548 = vpop.f32.mrf.mxu0
        %v1549 = vadd.f32 0.0, %v1548
        %v1550 = vpop.f32.mrf.mxu0
        %v1551 = vadd.f32 0.0, %v1550
        %1552 = vmatmul.bf16.gmra.mxu0 %v1486
        %v1553 = vpop.f32.mrf.mxu0
        %v1554 = vadd.f32 0.0, %v1553
        %v1555 = vpop.f32.mrf.mxu0
        %v1556 = vadd.f32 0.0, %v1555
        %1557 = vmatmul.bf16.gmra.mxu0 %v1489
        %v1558 = vpop.f32.mrf.mxu0
        %v1559 = vadd.f32 0.0, %v1558
        %v1560 = vpop.f32.mrf.mxu0
        %v1561 = vadd.f32 0.0, %v1560
        %1562 = vmatmul.bf16.gmra.mxu0 %v1492
        %v1563 = vpop.f32.mrf.mxu0
        %v1564 = vadd.f32 0.0, %v1563
        %v1565 = vpop.f32.mrf.mxu0
        %v1566 = vadd.f32 0.0, %v1565
        %1567 = vmatmul.bf16.gmra.mxu0 %v1495
        %v1568 = vpop.f32.mrf.mxu0
        %v1569 = vadd.f32 0.0, %v1568
        %v1570 = vpop.f32.mrf.mxu0
        %v1571 = vadd.f32 0.0, %v1570
        %1572 = vmatmul.bf16.gmra.mxu0 %v1498
        %v1573 = vpop.f32.mrf.mxu0
        %v1574 = vadd.f32 0.0, %v1573
        %v1575 = vpop.f32.mrf.mxu0
        %v1576 = vadd.f32 0.0, %v1575
        %1577 = vmatmul.bf16.gmra.mxu0 %v1501
        %v1578 = vpop.f32.mrf.mxu0
        %v1579 = vadd.f32 0.0, %v1578
        %v1580 = vpop.f32.mrf.mxu0
        %v1581 = vadd.f32 0.0, %v1580
        %1582 = vmatmul.bf16.gmra.mxu0 %v1504
        %v1583 = vpop.f32.mrf.mxu0
        %v1584 = vadd.f32 0.0, %v1583
        %v1585 = vpop.f32.mrf.mxu0
        %v1586 = vadd.f32 0.0, %v1585
        %1587 = vmatmul.bf16.gmra.mxu0 %v1507
        %v1588 = vpop.f32.mrf.mxu0
        %v1589 = vadd.f32 0.0, %v1588
        %v1590 = vpop.f32.mrf.mxu0
        %v1591 = vadd.f32 0.0, %v1590
        %1592 = vmatmul.bf16.gmra.mxu0 %v1510
        %v1593 = vpop.f32.mrf.mxu0
        %v1594 = vadd.f32 0.0, %v1593
        %v1595 = vpop.f32.mrf.mxu0
        %v1596 = vadd.f32 0.0, %v1595
        %1597 = vmatmul.bf16.gmra.mxu0 %v1513
        %v1598 = vpop.f32.mrf.mxu0
        %v1599 = vadd.f32 0.0, %v1598
        %v1600 = vpop.f32.mrf.mxu0
        %v1601 = vadd.f32 0.0, %v1600
        %1602 = vmatmul.bf16.gmra.mxu0 %v1516
        %v1603 = vpop.f32.mrf.mxu0
        %v1604 = vadd.f32 0.0, %v1603
        %v1605 = vpop.f32.mrf.mxu0
        %v1606 = vadd.f32 0.0, %v1605
        %1607 = vmatmul.bf16.gmra.mxu0 %v1519
        %v1608 = vpop.f32.mrf.mxu0
        %v1609 = vadd.f32 0.0, %v1608
        %v1610 = vpop.f32.mrf.mxu0
        %v1611 = vadd.f32 0.0, %v1610
        %1612 = vmatmul.bf16.gmra.mxu0 %v1522
        %v1613 = vpop.f32.mrf.mxu0
        %v1614 = vadd.f32 0.0, %v1613
        %v1615 = vpop.f32.mrf.mxu0
        %v1616 = vadd.f32 0.0, %v1615
        %1617 = vmatmul.bf16.gmra.mxu0 %v1525
        %v1618 = vpop.f32.mrf.mxu0
        %v1619 = vadd.f32 0.0, %v1618
        %v1620 = vpop.f32.mrf.mxu0
        %v1621 = vadd.f32 0.0, %v1620
        %1622 = vmatmul.bf16.gmra.mxu0 %v1528
        %v1623 = vpop.f32.mrf.mxu0
        %v1624 = vadd.f32 0.0, %v1623
        %v1625 = vpop.f32.mrf.mxu0
        %v1626 = vadd.f32 0.0, %v1625
        %1627 = vmatmul.bf16.gmra.mxu0 %v1531
        %v1628 = vpop.f32.mrf.mxu0
        %v1629 = vadd.f32 0.0, %v1628
        %v1630 = vpop.f32.mrf.mxu0
        %v1631 = vadd.f32 0.0, %v1630
        %1632 = vmatmul.bf16.gmra.mxu0 %v1534
        %v1633 = vpop.f32.mrf.mxu0
        %v1634 = vadd.f32 0.0, %v1633
        %v1635 = vpop.f32.mrf.mxu0
        %v1636 = vadd.f32 0.0, %v1635
        %1637 = vdwg.mxu0
        %v1638 = vadd.f32 %v1406, %v1549
        %v1639 = vadd.f32 %v1407, %v1551
        %v1640 = vadd.f32 %v1408, %v1554
        %v1641 = vadd.f32 %v1409, %v1556
        %v1642 = vadd.f32 %v1410, %v1559
        %v1643 = vadd.f32 %v1411, %v1561
        %v1644 = vadd.f32 %v1412, %v1564
        %v1645 = vadd.f32 %v1413, %v1566
        %v1646 = vadd.f32 %v1414, %v1569
        %v1647 = vadd.f32 %v1415, %v1571
        %v1648 = vadd.f32 %v1416, %v1574
        %v1649 = vadd.f32 %v1417, %v1576
        %v1650 = vadd.f32 %v1418, %v1579
        %v1651 = vadd.f32 %v1419, %v1581
        %v1652 = vadd.f32 %v1420, %v1584
        %v1653 = vadd.f32 %v1421, %v1586
        %v1654 = vadd.f32 %v1422, %v1589
        %v1655 = vadd.f32 %v1423, %v1591
        %v1656 = vadd.f32 %v1424, %v1594
        %v1657 = vadd.f32 %v1425, %v1596
        %v1658 = vadd.f32 %v1426, %v1599
        %v1659 = vadd.f32 %v1427, %v1601
        %v1660 = vadd.f32 %v1428, %v1604
        %v1661 = vadd.f32 %v1429, %v1606
        %v1662 = vadd.f32 %v1430, %v1609
        %v1663 = vadd.f32 %v1431, %v1611
        %v1664 = vadd.f32 %v1432, %v1614
        %v1665 = vadd.f32 %v1433, %v1616
        %v1666 = vadd.f32 %v1434, %v1619
        %v1667 = vadd.f32 %v1435, %v1621
        %v1668 = vadd.f32 %v1436, %v1624
        %v1669 = vadd.f32 %v1437, %v1626
        %v1670 = vadd.f32 %v1438, %v1629
        %v1671 = vadd.f32 %v1439, %v1631
        %v1672 = vadd.f32 %v1440, %v1634
        %v1673 = vadd.f32 %v1441, %v1636
        %v1674 = vpack.c.bf16 %v288, %v287
        %v1675 = vpack.c.bf16 %v289, %v289
        %s1676 = scalar_lea.vmem %s1, 12
        %v1677 = vld [vmem:[%s1676] sm:$0x3]
        %v1680 = vrot.slane %v1674, 2
        %v1681 = vsel %vm1444, %v1478, %v1680
        %v1682 = vrot.slane %v1675, 2
        %v1683 = vsel %vm1444, %v1680, %v1682
        %v1685 = vsel %vm461, %v1681, 0
        %v1688 = vsel %vm461, %v1683, 0
        %v1691 = vsel %vm516, %v1677, 0
        %1693 = vmatpush.bf16.msra.mxu0 0
        %1694 = vmatpush.bf16.msra.mxu0 0
        %1695 = vmatpush.bf16.msra.mxu0 0
        %1696 = vmatpush.bf16.msra.mxu0 0
        %1697 = vmatpush.bf16.msra.mxu0 0
        %1698 = vmatpush.bf16.msra.mxu0 0
        %1699 = vmatpush.bf16.msra.mxu0 0
        %1700 = vmatpush.bf16.msra.mxu0 %v1691
        %1701 = vmatmul.bf16.gmra.mxu0 %v1486
        %v1702 = vpop.f32.mrf.mxu0
        %v1703 = vadd.f32 0.0, %v1702
        %v1704 = vpop.f32.mrf.mxu0
        %v1705 = vadd.f32 0.0, %v1704
        %1706 = vmatmul.bf16.gmra.mxu0 %v1489
        %v1707 = vpop.f32.mrf.mxu0
        %v1708 = vadd.f32 0.0, %v1707
        %v1709 = vpop.f32.mrf.mxu0
        %v1710 = vadd.f32 0.0, %v1709
        %1711 = vmatmul.bf16.gmra.mxu0 %v1492
        %v1712 = vpop.f32.mrf.mxu0
        %v1713 = vadd.f32 0.0, %v1712
        %v1714 = vpop.f32.mrf.mxu0
        %v1715 = vadd.f32 0.0, %v1714
        %1716 = vmatmul.bf16.gmra.mxu0 %v1495
        %v1717 = vpop.f32.mrf.mxu0
        %v1718 = vadd.f32 0.0, %v1717
        %v1719 = vpop.f32.mrf.mxu0
        %v1720 = vadd.f32 0.0, %v1719
        %1721 = vmatmul.bf16.gmra.mxu0 %v1498
        %v1722 = vpop.f32.mrf.mxu0
        %v1723 = vadd.f32 0.0, %v1722
        %v1724 = vpop.f32.mrf.mxu0
        %v1725 = vadd.f32 0.0, %v1724
        %1726 = vmatmul.bf16.gmra.mxu0 %v1501
        %v1727 = vpop.f32.mrf.mxu0
        %v1728 = vadd.f32 0.0, %v1727
        %v1729 = vpop.f32.mrf.mxu0
        %v1730 = vadd.f32 0.0, %v1729
        %1731 = vmatmul.bf16.gmra.mxu0 %v1504
        %v1732 = vpop.f32.mrf.mxu0
        %v1733 = vadd.f32 0.0, %v1732
        %v1734 = vpop.f32.mrf.mxu0
        %v1735 = vadd.f32 0.0, %v1734
        %1736 = vmatmul.bf16.gmra.mxu0 %v1507
        %v1737 = vpop.f32.mrf.mxu0
        %v1738 = vadd.f32 0.0, %v1737
        %v1739 = vpop.f32.mrf.mxu0
        %v1740 = vadd.f32 0.0, %v1739
        %1741 = vmatmul.bf16.gmra.mxu0 %v1510
        %v1742 = vpop.f32.mrf.mxu0
        %v1743 = vadd.f32 0.0, %v1742
        %v1744 = vpop.f32.mrf.mxu0
        %v1745 = vadd.f32 0.0, %v1744
        %1746 = vmatmul.bf16.gmra.mxu0 %v1513
        %v1747 = vpop.f32.mrf.mxu0
        %v1748 = vadd.f32 0.0, %v1747
        %v1749 = vpop.f32.mrf.mxu0
        %v1750 = vadd.f32 0.0, %v1749
        %1751 = vmatmul.bf16.gmra.mxu0 %v1516
        %v1752 = vpop.f32.mrf.mxu0
        %v1753 = vadd.f32 0.0, %v1752
        %v1754 = vpop.f32.mrf.mxu0
        %v1755 = vadd.f32 0.0, %v1754
        %1756 = vmatmul.bf16.gmra.mxu0 %v1519
        %v1757 = vpop.f32.mrf.mxu0
        %v1758 = vadd.f32 0.0, %v1757
        %v1759 = vpop.f32.mrf.mxu0
        %v1760 = vadd.f32 0.0, %v1759
        %1761 = vmatmul.bf16.gmra.mxu0 %v1522
        %v1762 = vpop.f32.mrf.mxu0
        %v1763 = vadd.f32 0.0, %v1762
        %v1764 = vpop.f32.mrf.mxu0
        %v1765 = vadd.f32 0.0, %v1764
        %1766 = vmatmul.bf16.gmra.mxu0 %v1525
        %v1767 = vpop.f32.mrf.mxu0
        %v1768 = vadd.f32 0.0, %v1767
        %v1769 = vpop.f32.mrf.mxu0
        %v1770 = vadd.f32 0.0, %v1769
        %1771 = vmatmul.bf16.gmra.mxu0 %v1528
        %v1772 = vpop.f32.mrf.mxu0
        %v1773 = vadd.f32 0.0, %v1772
        %v1774 = vpop.f32.mrf.mxu0
        %v1775 = vadd.f32 0.0, %v1774
        %1776 = vmatmul.bf16.gmra.mxu0 %v1531
        %v1777 = vpop.f32.mrf.mxu0
        %v1778 = vadd.f32 0.0, %v1777
        %v1779 = vpop.f32.mrf.mxu0
        %v1780 = vadd.f32 0.0, %v1779
        %1781 = vmatmul.bf16.gmra.mxu0 %v1685
        %v1782 = vpop.f32.mrf.mxu0
        %v1783 = vadd.f32 0.0, %v1782
        %v1784 = vpop.f32.mrf.mxu0
        %v1785 = vadd.f32 0.0, %v1784
        %1786 = vmatmul.bf16.gmra.mxu0 %v1688
        %v1787 = vpop.f32.mrf.mxu0
        %v1788 = vadd.f32 0.0, %v1787
        %v1789 = vpop.f32.mrf.mxu0
        %v1790 = vadd.f32 0.0, %v1789
        %1791 = vdwg.mxu0
        %v1792 = vadd.f32 %v1638, %v1703
        %v1793 = vadd.f32 %v1639, %v1705
        %v1794 = vadd.f32 %v1640, %v1708
        %v1795 = vadd.f32 %v1641, %v1710
        %v1796 = vadd.f32 %v1642, %v1713
        %v1797 = vadd.f32 %v1643, %v1715
        %v1798 = vadd.f32 %v1644, %v1718
        %v1799 = vadd.f32 %v1645, %v1720
        %v1800 = vadd.f32 %v1646, %v1723
        %v1801 = vadd.f32 %v1647, %v1725
        %v1802 = vadd.f32 %v1648, %v1728
        %v1803 = vadd.f32 %v1649, %v1730
        %v1804 = vadd.f32 %v1650, %v1733
        %v1805 = vadd.f32 %v1651, %v1735
        %v1806 = vadd.f32 %v1652, %v1738
        %v1807 = vadd.f32 %v1653, %v1740
        %v1808 = vadd.f32 %v1654, %v1743
        %v1809 = vadd.f32 %v1655, %v1745
        %v1810 = vadd.f32 %v1656, %v1748
        %v1811 = vadd.f32 %v1657, %v1750
        %v1812 = vadd.f32 %v1658, %v1753
        %v1813 = vadd.f32 %v1659, %v1755
        %v1814 = vadd.f32 %v1660, %v1758
        %v1815 = vadd.f32 %v1661, %v1760
        %v1816 = vadd.f32 %v1662, %v1763
        %v1817 = vadd.f32 %v1663, %v1765
        %v1818 = vadd.f32 %v1664, %v1768
        %v1819 = vadd.f32 %v1665, %v1770
        %v1820 = vadd.f32 %v1666, %v1773
        %v1821 = vadd.f32 %v1667, %v1775
        %v1822 = vadd.f32 %v1668, %v1778
        %v1823 = vadd.f32 %v1669, %v1780
        %v1824 = vadd.f32 %v1670, %v1783
        %v1825 = vadd.f32 %v1671, %v1785
        %v1826 = vadd.f32 %v1672, %v1788
        %v1827 = vadd.f32 %v1673, %v1790
        %s1828 = scalar_lea.vmem %s1, 14
        %v1829 = vld [vmem:[%s1828] sm:$0x3]
        %vm1830 = vsmask.f32 5376
        %v1831 = vrot.slane %v333, 2
        %v1832 = vrot.slane %v329, 3
        %v1833 = vor.u32 %v1831, %v1832
        %v1834 = vrot.slane %v341, 2
        %v1835 = vrot.slane %v337, 3
        %v1836 = vor.u32 %v1834, %v1835
        %v1837 = vsel %vm1830, %v1833, %v1836
        %v1838 = vrot.slane %v349, 2
        %v1839 = vrot.slane %v345, 3
        %v1840 = vor.u32 %v1838, %v1839
        %v1841 = vsel %vm1830, %v1836, %v1840
        %v1842 = vrot.slane %v357, 2
        %v1843 = vrot.slane %v353, 3
        %v1844 = vor.u32 %v1842, %v1843
        %v1845 = vsel %vm1830, %v1840, %v1844
        %v1846 = vrot.slane %v365, 2
        %v1847 = vrot.slane %v361, 3
        %v1848 = vor.u32 %v1846, %v1847
        %v1849 = vsel %vm1830, %v1844, %v1848
        %v1850 = vrot.slane %v373, 2
        %v1851 = vrot.slane %v369, 3
        %v1852 = vor.u32 %v1850, %v1851
        %v1853 = vsel %vm1830, %v1848, %v1852
        %v1854 = vrot.slane %v381, 2
        %v1855 = vrot.slane %v377, 3
        %v1856 = vor.u32 %v1854, %v1855
        %v1857 = vsel %vm1830, %v1852, %v1856
        %v1858 = vrot.slane %v389, 2
        %v1859 = vrot.slane %v385, 3
        %v1860 = vor.u32 %v1858, %v1859
        %v1861 = vsel %vm1830, %v1856, %v1860
        %v1862 = vrot.slane %v397, 2
        %v1863 = vrot.slane %v393, 3
        %v1864 = vor.u32 %v1862, %v1863
        %v1865 = vsel %vm1830, %v1860, %v1864
        %v1866 = vrot.slane %v405, 2
        %v1867 = vrot.slane %v401, 3
        %v1868 = vor.u32 %v1866, %v1867
        %v1869 = vsel %vm1830, %v1864, %v1868
        %v1870 = vrot.slane %v413, 2
        %v1871 = vrot.slane %v409, 3
        %v1872 = vor.u32 %v1870, %v1871
        %v1873 = vsel %vm1830, %v1868, %v1872
        %v1874 = vrot.slane %v421, 2
        %v1875 = vrot.slane %v417, 3
        %v1876 = vor.u32 %v1874, %v1875
        %v1877 = vsel %vm1830, %v1872, %v1876
        %v1878 = vrot.slane %v429, 2
        %v1879 = vrot.slane %v425, 3
        %v1880 = vor.u32 %v1878, %v1879
        %v1881 = vsel %vm1830, %v1876, %v1880
        %v1882 = vrot.slane %v437, 2
        %v1883 = vrot.slane %v433, 3
        %v1884 = vor.u32 %v1882, %v1883
        %v1885 = vsel %vm1830, %v1880, %v1884
        %v1886 = vrot.slane %v445, 2
        %v1887 = vrot.slane %v441, 3
        %v1888 = vor.u32 %v1886, %v1887
        %v1889 = vsel %vm1830, %v1884, %v1888
        %v1890 = vrot.slane %v453, 2
        %v1891 = vrot.slane %v449, 3
        %v1892 = vor.u32 %v1890, %v1891
        %v1893 = vsel %vm1830, %v1888, %v1892
        %v1894 = vrot.slane %v1233, 2
        %v1895 = vrot.slane %v1236, 3
        %v1896 = vor.u32 %v1894, %v1895
        %v1897 = vsel %vm1830, %v1892, %v1896
        %v1899 = vshrl.u32 %v1674, 16
        %v1901 = vrot.slane %v1899, 2
        %v1902 = vshll.u32 %v1674, 16
        %v1904 = vrot.slane %v1902, 3
        %v1905 = vor.u32 %v1901, %v1904
        %v1906 = vsel %vm1830, %v1896, %v1905
        %v1908 = vshrl.u32 %v1675, 16
        %v1910 = vrot.slane %v1908, 2
        %v1911 = vshll.u32 %v1675, 16
        %v1913 = vrot.slane %v1911, 3
        %v1914 = vor.u32 %v1910, %v1913
        %v1915 = vsel %vm1830, %v1905, %v1914
        %v1917 = vsel %vm461, %v1837, 0
        %v1920 = vsel %vm461, %v1841, 0
        %v1923 = vsel %vm461, %v1845, 0
        %v1926 = vsel %vm461, %v1849, 0
        %v1929 = vsel %vm461, %v1853, 0
        %v1932 = vsel %vm461, %v1857, 0
        %v1935 = vsel %vm461, %v1861, 0
        %v1938 = vsel %vm461, %v1865, 0
        %v1941 = vsel %vm461, %v1869, 0
        %v1944 = vsel %vm461, %v1873, 0
        %v1947 = vsel %vm461, %v1877, 0
        %v1950 = vsel %vm461, %v1881, 0
        %v1953 = vsel %vm461, %v1885, 0
        %v1956 = vsel %vm461, %v1889, 0
        %v1959 = vsel %vm461, %v1893, 0
        %v1962 = vsel %vm461, %v1897, 0
        %v1965 = vsel %vm461, %v1906, 0
        %v1968 = vsel %vm461, %v1915, 0
        %v1971 = vsel %vm516, %v1829, 0
        %1973 = vmatpush.bf16.msra.mxu0 0
        %1974 = vmatpush.bf16.msra.mxu0 0
        %1975 = vmatpush.bf16.msra.mxu0 0
        %1976 = vmatpush.bf16.msra.mxu0 0
        %1977 = vmatpush.bf16.msra.mxu0 0
        %1978 = vmatpush.bf16.msra.mxu0 0
        %1979 = vmatpush.bf16.msra.mxu0 0
        %1980 = vmatpush.bf16.msra.mxu0 %v1971
        %1981 = vmatmul.bf16.gmra.mxu0 %v1917
        %v1982 = vpop.f32.mrf.mxu0
        %v1983 = vadd.f32 0.0, %v1982
        %v1984 = vpop.f32.mrf.mxu0
        %v1985 = vadd.f32 0.0, %v1984
        %1986 = vmatmul.bf16.gmra.mxu0 %v1920
        %v1987 = vpop.f32.mrf.mxu0
        %v1988 = vadd.f32 0.0, %v1987
        %v1989 = vpop.f32.mrf.mxu0
        %v1990 = vadd.f32 0.0, %v1989
        %1991 = vmatmul.bf16.gmra.mxu0 %v1923
        %v1992 = vpop.f32.mrf.mxu0
        %v1993 = vadd.f32 0.0, %v1992
        %v1994 = vpop.f32.mrf.mxu0
        %v1995 = vadd.f32 0.0, %v1994
        %1996 = vmatmul.bf16.gmra.mxu0 %v1926
        %v1997 = vpop.f32.mrf.mxu0
        %v1998 = vadd.f32 0.0, %v1997
        %v1999 = vpop.f32.mrf.mxu0
        %v2000 = vadd.f32 0.0, %v1999
        %2001 = vmatmul.bf16.gmra.mxu0 %v1929
        %v2002 = vpop.f32.mrf.mxu0
        %v2003 = vadd.f32 0.0, %v2002
        %v2004 = vpop.f32.mrf.mxu0
        %v2005 = vadd.f32 0.0, %v2004
        %2006 = vmatmul.bf16.gmra.mxu0 %v1932
        %v2007 = vpop.f32.mrf.mxu0
        %v2008 = vadd.f32 0.0, %v2007
        %v2009 = vpop.f32.mrf.mxu0
        %v2010 = vadd.f32 0.0, %v2009
        %2011 = vmatmul.bf16.gmra.mxu0 %v1935
        %v2012 = vpop.f32.mrf.mxu0
        %v2013 = vadd.f32 0.0, %v2012
        %v2014 = vpop.f32.mrf.mxu0
        %v2015 = vadd.f32 0.0, %v2014
        %2016 = vmatmul.bf16.gmra.mxu0 %v1938
        %v2017 = vpop.f32.mrf.mxu0
        %v2018 = vadd.f32 0.0, %v2017
        %v2019 = vpop.f32.mrf.mxu0
        %v2020 = vadd.f32 0.0, %v2019
        %2021 = vmatmul.bf16.gmra.mxu0 %v1941
        %v2022 = vpop.f32.mrf.mxu0
        %v2023 = vadd.f32 0.0, %v2022
        %v2024 = vpop.f32.mrf.mxu0
        %v2025 = vadd.f32 0.0, %v2024
        %2026 = vmatmul.bf16.gmra.mxu0 %v1944
        %v2027 = vpop.f32.mrf.mxu0
        %v2028 = vadd.f32 0.0, %v2027
        %v2029 = vpop.f32.mrf.mxu0
        %v2030 = vadd.f32 0.0, %v2029
        %2031 = vmatmul.bf16.gmra.mxu0 %v1947
        %v2032 = vpop.f32.mrf.mxu0
        %v2033 = vadd.f32 0.0, %v2032
        %v2034 = vpop.f32.mrf.mxu0
        %v2035 = vadd.f32 0.0, %v2034
        %2036 = vmatmul.bf16.gmra.mxu0 %v1950
        %v2037 = vpop.f32.mrf.mxu0
        %v2038 = vadd.f32 0.0, %v2037
        %v2039 = vpop.f32.mrf.mxu0
        %v2040 = vadd.f32 0.0, %v2039
        %2041 = vmatmul.bf16.gmra.mxu0 %v1953
        %v2042 = vpop.f32.mrf.mxu0
        %v2043 = vadd.f32 0.0, %v2042
        %v2044 = vpop.f32.mrf.mxu0
        %v2045 = vadd.f32 0.0, %v2044
        %2046 = vmatmul.bf16.gmra.mxu0 %v1956
        %v2047 = vpop.f32.mrf.mxu0
        %v2048 = vadd.f32 0.0, %v2047
        %v2049 = vpop.f32.mrf.mxu0
        %v2050 = vadd.f32 0.0, %v2049
        %2051 = vmatmul.bf16.gmra.mxu0 %v1959
        %v2052 = vpop.f32.mrf.mxu0
        %v2053 = vadd.f32 0.0, %v2052
        %v2054 = vpop.f32.mrf.mxu0
        %v2055 = vadd.f32 0.0, %v2054
        %2056 = vmatmul.bf16.gmra.mxu0 %v1962
        %v2057 = vpop.f32.mrf.mxu0
        %v2058 = vadd.f32 0.0, %v2057
        %v2059 = vpop.f32.mrf.mxu0
        %v2060 = vadd.f32 0.0, %v2059
        %2061 = vmatmul.bf16.gmra.mxu0 %v1965
        %v2062 = vpop.f32.mrf.mxu0
        %v2063 = vadd.f32 0.0, %v2062
        %v2064 = vpop.f32.mrf.mxu0
        %v2065 = vadd.f32 0.0, %v2064
        %2066 = vmatmul.bf16.gmra.mxu0 %v1968
        %v2067 = vpop.f32.mrf.mxu0
        %v2068 = vadd.f32 0.0, %v2067
        %v2069 = vpop.f32.mrf.mxu0
        %v2070 = vadd.f32 0.0, %v2069
        %2071 = vdwg.mxu0
        %v2072 = vadd.f32 %v1792, %v1983
        %v2073 = vadd.f32 %v1793, %v1985
        %v2074 = vadd.f32 %v1794, %v1988
        %v2075 = vadd.f32 %v1795, %v1990
        %v2076 = vadd.f32 %v1796, %v1993
        %v2077 = vadd.f32 %v1797, %v1995
        %v2078 = vadd.f32 %v1798, %v1998
        %v2079 = vadd.f32 %v1799, %v2000
        %v2080 = vadd.f32 %v1800, %v2003
        %v2081 = vadd.f32 %v1801, %v2005
        %v2082 = vadd.f32 %v1802, %v2008
        %v2083 = vadd.f32 %v1803, %v2010
        %v2084 = vadd.f32 %v1804, %v2013
        %v2085 = vadd.f32 %v1805, %v2015
        %v2086 = vadd.f32 %v1806, %v2018
        %v2087 = vadd.f32 %v1807, %v2020
        %v2088 = vadd.f32 %v1808, %v2023
        %v2089 = vadd.f32 %v1809, %v2025
        %v2090 = vadd.f32 %v1810, %v2028
        %v2091 = vadd.f32 %v1811, %v2030
        %v2092 = vadd.f32 %v1812, %v2033
        %v2093 = vadd.f32 %v1813, %v2035
        %v2094 = vadd.f32 %v1814, %v2038
        %v2095 = vadd.f32 %v1815, %v2040
        %v2096 = vadd.f32 %v1816, %v2043
        %v2097 = vadd.f32 %v1817, %v2045
        %v2098 = vadd.f32 %v1818, %v2048
        %v2099 = vadd.f32 %v1819, %v2050
        %v2100 = vadd.f32 %v1820, %v2053
        %v2101 = vadd.f32 %v1821, %v2055
        %v2102 = vadd.f32 %v1822, %v2058
        %v2103 = vadd.f32 %v1823, %v2060
        %v2104 = vadd.f32 %v1824, %v2063
        %v2105 = vadd.f32 %v1825, %v2065
        %v2106 = vadd.f32 %v1826, %v2068
        %v2107 = vadd.f32 %v1827, %v2070
        %s2108 = scalar_lea.vmem %s1, 16
        %v2109 = vld [vmem:[%s2108] sm:$0x3]
        %vm2110 = vcmask 1044480
        %v2111 = vrot.slane %v292, 3
        %v2112 = vrot.slane %v293, 3
        %v2113 = vsel %vm2110, %v2111, %v2112
        %v2114 = vrot.slane %v294, 3
        %v2115 = vsel %vm2110, %v2112, %v2114
        %v2116 = vrot.slane %v295, 3
        %v2117 = vsel %vm2110, %v2114, %v2116
        %v2118 = vrot.slane %v296, 3
        %v2119 = vsel %vm2110, %v2116, %v2118
        %v2120 = vrot.slane %v297, 3
        %v2121 = vsel %vm2110, %v2118, %v2120
        %v2122 = vrot.slane %v298, 3
        %v2123 = vsel %vm2110, %v2120, %v2122
        %v2124 = vrot.slane %v299, 3
        %v2125 = vsel %vm2110, %v2122, %v2124
        %v2126 = vrot.slane %v300, 3
        %v2127 = vsel %vm2110, %v2124, %v2126
        %v2128 = vrot.slane %v301, 3
        %v2129 = vsel %vm2110, %v2126, %v2128
        %v2130 = vrot.slane %v302, 3
        %v2131 = vsel %vm2110, %v2128, %v2130
        %v2132 = vrot.slane %v303, 3
        %v2133 = vsel %vm2110, %v2130, %v2132
        %v2134 = vrot.slane %v304, 3
        %v2135 = vsel %vm2110, %v2132, %v2134
        %v2136 = vrot.slane %v305, 3
        %v2137 = vsel %vm2110, %v2134, %v2136
        %v2138 = vrot.slane %v306, 3
        %v2139 = vsel %vm2110, %v2136, %v2138
        %v2140 = vrot.slane %v307, 3
        %v2141 = vsel %vm2110, %v2138, %v2140
        %v2142 = vrot.slane %v1008, 3
        %v2143 = vsel %vm2110, %v2140, %v2142
        %v2144 = vrot.slane %v1674, 3
        %v2145 = vsel %vm2110, %v2142, %v2144
        %v2146 = vrot.slane %v1675, 3
        %v2147 = vsel %vm2110, %v2144, %v2146
        %v2149 = vsel %vm461, %v2113, 0
        %v2152 = vsel %vm461, %v2115, 0
        %v2155 = vsel %vm461, %v2117, 0
        %v2158 = vsel %vm461, %v2119, 0
        %v2161 = vsel %vm461, %v2121, 0
        %v2164 = vsel %vm461, %v2123, 0
        %v2167 = vsel %vm461, %v2125, 0
        %v2170 = vsel %vm461, %v2127, 0
        %v2173 = vsel %vm461, %v2129, 0
        %v2176 = vsel %vm461, %v2131, 0
        %v2179 = vsel %vm461, %v2133, 0
        %v2182 = vsel %vm461, %v2135, 0
        %v2185 = vsel %vm461, %v2137, 0
        %v2188 = vsel %vm461, %v2139, 0
        %v2191 = vsel %vm461, %v2141, 0
        %v2194 = vsel %vm461, %v2143, 0
        %v2197 = vsel %vm461, %v2145, 0
        %v2200 = vsel %vm461, %v2147, 0
        %v2203 = vsel %vm516, %v2109, 0
        %2205 = vmatpush.bf16.msra.mxu0 0
        %2206 = vmatpush.bf16.msra.mxu0 0
        %2207 = vmatpush.bf16.msra.mxu0 0
        %2208 = vmatpush.bf16.msra.mxu0 0
        %2209 = vmatpush.bf16.msra.mxu0 0
        %2210 = vmatpush.bf16.msra.mxu0 0
        %2211 = vmatpush.bf16.msra.mxu0 0
        %2212 = vmatpush.bf16.msra.mxu0 %v2203
        %2213 = vmatmul.bf16.gmra.mxu0 %v2149
        %v2214 = vpop.f32.mrf.mxu0
        %v2215 = vadd.f32 0.0, %v2214
        %v2216 = vpop.f32.mrf.mxu0
        %v2217 = vadd.f32 0.0, %v2216
        %2218 = vmatmul.bf16.gmra.mxu0 %v2152
        %v2219 = vpop.f32.mrf.mxu0
        %v2220 = vadd.f32 0.0, %v2219
        %v2221 = vpop.f32.mrf.mxu0
        %v2222 = vadd.f32 0.0, %v2221
        %2223 = vmatmul.bf16.gmra.mxu0 %v2155
        %v2224 = vpop.f32.mrf.mxu0
        %v2225 = vadd.f32 0.0, %v2224
        %v2226 = vpop.f32.mrf.mxu0
        %v2227 = vadd.f32 0.0, %v2226
        %2228 = vmatmul.bf16.gmra.mxu0 %v2158
        %v2229 = vpop.f32.mrf.mxu0
        %v2230 = vadd.f32 0.0, %v2229
        %v2231 = vpop.f32.mrf.mxu0
        %v2232 = vadd.f32 0.0, %v2231
        %2233 = vmatmul.bf16.gmra.mxu0 %v2161
        %v2234 = vpop.f32.mrf.mxu0
        %v2235 = vadd.f32 0.0, %v2234
        %v2236 = vpop.f32.mrf.mxu0
        %v2237 = vadd.f32 0.0, %v2236
        %2238 = vmatmul.bf16.gmra.mxu0 %v2164
        %v2239 = vpop.f32.mrf.mxu0
        %v2240 = vadd.f32 0.0, %v2239
        %v2241 = vpop.f32.mrf.mxu0
        %v2242 = vadd.f32 0.0, %v2241
        %2243 = vmatmul.bf16.gmra.mxu0 %v2167
        %v2244 = vpop.f32.mrf.mxu0
        %v2245 = vadd.f32 0.0, %v2244
        %v2246 = vpop.f32.mrf.mxu0
        %v2247 = vadd.f32 0.0, %v2246
        %2248 = vmatmul.bf16.gmra.mxu0 %v2170
        %v2249 = vpop.f32.mrf.mxu0
        %v2250 = vadd.f32 0.0, %v2249
        %v2251 = vpop.f32.mrf.mxu0
        %v2252 = vadd.f32 0.0, %v2251
        %2253 = vmatmul.bf16.gmra.mxu0 %v2173
        %v2254 = vpop.f32.mrf.mxu0
        %v2255 = vadd.f32 0.0, %v2254
        %v2256 = vpop.f32.mrf.mxu0
        %v2257 = vadd.f32 0.0, %v2256
        %2258 = vmatmul.bf16.gmra.mxu0 %v2176
        %v2259 = vpop.f32.mrf.mxu0
        %v2260 = vadd.f32 0.0, %v2259
        %v2261 = vpop.f32.mrf.mxu0
        %v2262 = vadd.f32 0.0, %v2261
        %2263 = vmatmul.bf16.gmra.mxu0 %v2179
        %v2264 = vpop.f32.mrf.mxu0
        %v2265 = vadd.f32 0.0, %v2264
        %v2266 = vpop.f32.mrf.mxu0
        %v2267 = vadd.f32 0.0, %v2266
        %2268 = vmatmul.bf16.gmra.mxu0 %v2182
        %v2269 = vpop.f32.mrf.mxu0
        %v2270 = vadd.f32 0.0, %v2269
        %v2271 = vpop.f32.mrf.mxu0
        %v2272 = vadd.f32 0.0, %v2271
        %2273 = vmatmul.bf16.gmra.mxu0 %v2185
        %v2274 = vpop.f32.mrf.mxu0
        %v2275 = vadd.f32 0.0, %v2274
        %v2276 = vpop.f32.mrf.mxu0
        %v2277 = vadd.f32 0.0, %v2276
        %2278 = vmatmul.bf16.gmra.mxu0 %v2188
        %v2279 = vpop.f32.mrf.mxu0
        %v2280 = vadd.f32 0.0, %v2279
        %v2281 = vpop.f32.mrf.mxu0
        %v2282 = vadd.f32 0.0, %v2281
        %2283 = vmatmul.bf16.gmra.mxu0 %v2191
        %v2284 = vpop.f32.mrf.mxu0
        %v2285 = vadd.f32 0.0, %v2284
        %v2286 = vpop.f32.mrf.mxu0
        %v2287 = vadd.f32 0.0, %v2286
        %2288 = vmatmul.bf16.gmra.mxu0 %v2194
        %v2289 = vpop.f32.mrf.mxu0
        %v2290 = vadd.f32 0.0, %v2289
        %v2291 = vpop.f32.mrf.mxu0
        %v2292 = vadd.f32 0.0, %v2291
        %2293 = vmatmul.bf16.gmra.mxu0 %v2197
        %v2294 = vpop.f32.mrf.mxu0
        %v2295 = vadd.f32 0.0, %v2294
        %v2296 = vpop.f32.mrf.mxu0
        %v2297 = vadd.f32 0.0, %v2296
        %2298 = vmatmul.bf16.gmra.mxu0 %v2200
        %v2299 = vpop.f32.mrf.mxu0
        %v2300 = vadd.f32 0.0, %v2299
        %v2301 = vpop.f32.mrf.mxu0
        %v2302 = vadd.f32 0.0, %v2301
        %2303 = vdwg.mxu0
        %v2304 = vadd.f32 %v2072, %v2215
        %v2305 = vadd.f32 %v2073, %v2217
        %v2306 = vadd.f32 %v2074, %v2220
        %v2307 = vadd.f32 %v2075, %v2222
        %v2308 = vadd.f32 %v2076, %v2225
        %v2309 = vadd.f32 %v2077, %v2227
        %v2310 = vadd.f32 %v2078, %v2230
        %v2311 = vadd.f32 %v2079, %v2232
        %v2312 = vadd.f32 %v2080, %v2235
        %v2313 = vadd.f32 %v2081, %v2237
        %v2314 = vadd.f32 %v2082, %v2240
        %v2315 = vadd.f32 %v2083, %v2242
        %v2316 = vadd.f32 %v2084, %v2245
        %v2317 = vadd.f32 %v2085, %v2247
        %v2318 = vadd.f32 %v2086, %v2250
        %v2319 = vadd.f32 %v2087, %v2252
        %v2320 = vadd.f32 %v2088, %v2255
        %v2321 = vadd.f32 %v2089, %v2257
        %v2322 = vadd.f32 %v2090, %v2260
        %v2323 = vadd.f32 %v2091, %v2262
        %v2324 = vadd.f32 %v2092, %v2265
        %v2325 = vadd.f32 %v2093, %v2267
        %v2326 = vadd.f32 %v2094, %v2270
        %v2327 = vadd.f32 %v2095, %v2272
        %v2328 = vadd.f32 %v2096, %v2275
        %v2329 = vadd.f32 %v2097, %v2277
        %v2330 = vadd.f32 %v2098, %v2280
        %v2331 = vadd.f32 %v2099, %v2282
        %v2332 = vadd.f32 %v2100, %v2285
        %v2333 = vadd.f32 %v2101, %v2287
        %v2334 = vadd.f32 %v2102, %v2290
        %v2335 = vadd.f32 %v2103, %v2292
        %v2336 = vadd.f32 %v2104, %v2295
        %v2337 = vadd.f32 %v2105, %v2297
        %v2338 = vadd.f32 %v2106, %v2300
        %v2339 = vadd.f32 %v2107, %v2302
        %2340 = vst [vmem:[%s194] sm:$0xff] %v2304
        %2341 = vst [vmem:[%s194 + $0x8] sm:$0xff] %v2305
        %2342 = vst [vmem:[%s194 + $0x10] sm:$0xff] %v2306
        %2343 = vst [vmem:[%s194 + $0x18] sm:$0xff] %v2307
        %2344 = vst [vmem:[%s194 + $0x20] sm:$0xff] %v2308
        %2345 = vst [vmem:[%s194 + $0x28] sm:$0xff] %v2309
        %2346 = vst [vmem:[%s194 + $0x30] sm:$0xff] %v2310
        %2347 = vst [vmem:[%s194 + $0x38] sm:$0xff] %v2311
        %2348 = vst [vmem:[%s194 + $0x40] sm:$0xff] %v2312
        %2349 = vst [vmem:[%s194 + $0x48] sm:$0xff] %v2313
        %2350 = vst [vmem:[%s194 + $0x50] sm:$0xff] %v2314
        %2351 = vst [vmem:[%s194 + $0x58] sm:$0xff] %v2315
        %2352 = vst [vmem:[%s194 + $0x60] sm:$0xff] %v2316
        %2353 = vst [vmem:[%s194 + $0x68] sm:$0xff] %v2317
        %2354 = vst [vmem:[%s194 + $0x70] sm:$0xff] %v2318
        %2355 = vst [vmem:[%s194 + $0x78] sm:$0xff] %v2319
        %2356 = vst [vmem:[%s194 + $0x80] sm:$0xff] %v2320
        %2357 = vst [vmem:[%s194 + $0x88] sm:$0xff] %v2321
        %2358 = vst [vmem:[%s194 + $0x90] sm:$0xff] %v2322
        %2359 = vst [vmem:[%s194 + $0x98] sm:$0xff] %v2323
        %2360 = vst [vmem:[%s194 + $0xa0] sm:$0xff] %v2324
        %2361 = vst [vmem:[%s194 + $0xa8] sm:$0xff] %v2325
        %2362 = vst [vmem:[%s194 + $0xb0] sm:$0xff] %v2326
        %2363 = vst [vmem:[%s194 + $0xb8] sm:$0xff] %v2327
        %2364 = vst [vmem:[%s194 + $0xc0] sm:$0xff] %v2328
        %2365 = vst [vmem:[%s194 + $0xc8] sm:$0xff] %v2329
        %2366 = vst [vmem:[%s194 + $0xd0] sm:$0xff] %v2330
        %2367 = vst [vmem:[%s194 + $0xd8] sm:$0xff] %v2331
        %2368 = vst [vmem:[%s194 + $0xe0] sm:$0xff] %v2332
        %2369 = vst [vmem:[%s194 + $0xe8] sm:$0xff] %v2333
        %2370 = vst [vmem:[%s194 + $0xf0] sm:$0xff] %v2334
        %2371 = vst [vmem:[%s194 + $0xf8] sm:$0xff] %v2335
        %2372 = vst [vmem:[%s194 + $0x100] sm:$0xff] %v2336
        %2373 = vst [vmem:[%s194 + $0x108] sm:$0xff] %v2337
        %2374 = vst [vmem:[%s194 + $0x110] sm:$0xff] %v2338
        %2375 = vst [vmem:[%s194 + $0x118] sm:$0xff] %v2339
        %v2376 = vld [vmem:[%s2] sm:$0xff]
        %v2377 = vld [vmem:[%s2 + $0x8] sm:$0xff]
        %v2378 = vld [vmem:[%s2 + $0x10] sm:$0xff]
        %v2379 = vld [vmem:[%s2 + $0x18] sm:$0xff]
        %v2380 = vld [vmem:[%s2 + $0x20] sm:$0xff]
        %v2381 = vld [vmem:[%s2 + $0x28] sm:$0xff]
        %v2382 = vld [vmem:[%s2 + $0x30] sm:$0xff]
        %v2383 = vld [vmem:[%s2 + $0x38] sm:$0xff]
        %v2384 = vld [vmem:[%s2 + $0x40] sm:$0xff]
        %v2385 = vld [vmem:[%s2 + $0x48] sm:$0xff]
        %v2386 = vld [vmem:[%s2 + $0x50] sm:$0xff]
        %v2387 = vld [vmem:[%s2 + $0x58] sm:$0xff]
        %v2388 = vld [vmem:[%s2 + $0x60] sm:$0xff]
        %v2389 = vld [vmem:[%s2 + $0x68] sm:$0xff]
        %v2390 = vld [vmem:[%s2 + $0x70] sm:$0xff]
        %v2391 = vld [vmem:[%s2 + $0x78] sm:$0xff]
        %v2392 = vld [vmem:[%s2 + $0x80] sm:$0xff]
        %v2393 = vld [vmem:[%s2 + $0x88] sm:$0xff]
        %v2394 = vld [vmem:[%s2 + $0x90] sm:$0xff]
        %v2395 = vld [vmem:[%s2 + $0x98] sm:$0xff]
        %v2396 = vld [vmem:[%s2 + $0xa0] sm:$0xff]
        %v2397 = vld [vmem:[%s2 + $0xa8] sm:$0xff]
        %v2398 = vld [vmem:[%s2 + $0xb0] sm:$0xff]
        %v2399 = vld [vmem:[%s2 + $0xb8] sm:$0xff]
        %v2400 = vld [vmem:[%s2 + $0xc0] sm:$0xff]
        %v2401 = vld [vmem:[%s2 + $0xc8] sm:$0xff]
        %v2402 = vld [vmem:[%s2 + $0xd0] sm:$0xff]
        %v2403 = vld [vmem:[%s2 + $0xd8] sm:$0xff]
        %v2404 = vld [vmem:[%s2 + $0xe0] sm:$0xff]
        %v2405 = vld [vmem:[%s2 + $0xe8] sm:$0xff]
        %v2406 = vld [vmem:[%s2 + $0xf0] sm:$0xff]
        %v2407 = vld [vmem:[%s2 + $0xf8] sm:$0xff]
        %v2408 = vld [vmem:[%s2 + $0x100] sm:$0xff]
        %v2409 = vld [vmem:[%s2 + $0x108] sm:$0xff]
        %v2410 = vld [vmem:[%s2 + $0x110] sm:$0xff]
        %v2411 = vld [vmem:[%s2 + $0x118] sm:$0xff]
        %2413 = vset.pattern.permute.xlu0 0
        %2414 = vperm.xlu0 %2413, %v2376
        %v2415 = vpop.permute.xlu0 %2414
        %2418 = vset.pattern.permute.xlu0 0
        %2419 = vperm.xlu0 %2418, %v2377
        %v2420 = vpop.permute.xlu0 %2419
        %2423 = vset.pattern.permute.xlu0 0
        %2424 = vperm.xlu0 %2423, %v2378
        %v2425 = vpop.permute.xlu0 %2424
        %2428 = vset.pattern.permute.xlu0 0
        %2429 = vperm.xlu0 %2428, %v2379
        %v2430 = vpop.permute.xlu0 %2429
        %2433 = vset.pattern.permute.xlu0 0
        %2434 = vperm.xlu0 %2433, %v2380
        %v2435 = vpop.permute.xlu0 %2434
        %2438 = vset.pattern.permute.xlu0 0
        %2439 = vperm.xlu0 %2438, %v2381
        %v2440 = vpop.permute.xlu0 %2439
        %2443 = vset.pattern.permute.xlu0 0
        %2444 = vperm.xlu0 %2443, %v2382
        %v2445 = vpop.permute.xlu0 %2444
        %2448 = vset.pattern.permute.xlu0 0
        %2449 = vperm.xlu0 %2448, %v2383
        %v2450 = vpop.permute.xlu0 %2449
        %2453 = vset.pattern.permute.xlu0 0
        %2454 = vperm.xlu0 %2453, %v2384
        %v2455 = vpop.permute.xlu0 %2454
        %2458 = vset.pattern.permute.xlu0 0
        %2459 = vperm.xlu0 %2458, %v2385
        %v2460 = vpop.permute.xlu0 %2459
        %2463 = vset.pattern.permute.xlu0 0
        %2464 = vperm.xlu0 %2463, %v2386
        %v2465 = vpop.permute.xlu0 %2464
        %2468 = vset.pattern.permute.xlu0 0
        %2469 = vperm.xlu0 %2468, %v2387
        %v2470 = vpop.permute.xlu0 %2469
        %2473 = vset.pattern.permute.xlu0 0
        %2474 = vperm.xlu0 %2473, %v2388
        %v2475 = vpop.permute.xlu0 %2474
        %2478 = vset.pattern.permute.xlu0 0
        %2479 = vperm.xlu0 %2478, %v2389
        %v2480 = vpop.permute.xlu0 %2479
        %2483 = vset.pattern.permute.xlu0 0
        %2484 = vperm.xlu0 %2483, %v2390
        %v2485 = vpop.permute.xlu0 %2484
        %2488 = vset.pattern.permute.xlu0 0
        %2489 = vperm.xlu0 %2488, %v2391
        %v2490 = vpop.permute.xlu0 %2489
        %2493 = vset.pattern.permute.xlu0 0
        %2494 = vperm.xlu0 %2493, %v2392
        %v2495 = vpop.permute.xlu0 %2494
        %2498 = vset.pattern.permute.xlu0 0
        %2499 = vperm.xlu0 %2498, %v2393
        %v2500 = vpop.permute.xlu0 %2499
        %2503 = vset.pattern.permute.xlu0 0
        %2504 = vperm.xlu0 %2503, %v2394
        %v2505 = vpop.permute.xlu0 %2504
        %2508 = vset.pattern.permute.xlu0 0
        %2509 = vperm.xlu0 %2508, %v2395
        %v2510 = vpop.permute.xlu0 %2509
        %2513 = vset.pattern.permute.xlu0 0
        %2514 = vperm.xlu0 %2513, %v2396
        %v2515 = vpop.permute.xlu0 %2514
        %2518 = vset.pattern.permute.xlu0 0
        %2519 = vperm.xlu0 %2518, %v2397
        %v2520 = vpop.permute.xlu0 %2519
        %2523 = vset.pattern.permute.xlu0 0
        %2524 = vperm.xlu0 %2523, %v2398
        %v2525 = vpop.permute.xlu0 %2524
        %2528 = vset.pattern.permute.xlu0 0
        %2529 = vperm.xlu0 %2528, %v2399
        %v2530 = vpop.permute.xlu0 %2529
        %2533 = vset.pattern.permute.xlu0 0
        %2534 = vperm.xlu0 %2533, %v2400
        %v2535 = vpop.permute.xlu0 %2534
        %2538 = vset.pattern.permute.xlu0 0
        %2539 = vperm.xlu0 %2538, %v2401
        %v2540 = vpop.permute.xlu0 %2539
        %2543 = vset.pattern.permute.xlu0 0
        %2544 = vperm.xlu0 %2543, %v2402
        %v2545 = vpop.permute.xlu0 %2544
        %2548 = vset.pattern.permute.xlu0 0
        %2549 = vperm.xlu0 %2548, %v2403
        %v2550 = vpop.permute.xlu0 %2549
        %2553 = vset.pattern.permute.xlu0 0
        %2554 = vperm.xlu0 %2553, %v2404
        %v2555 = vpop.permute.xlu0 %2554
        %2558 = vset.pattern.permute.xlu0 0
        %2559 = vperm.xlu0 %2558, %v2405
        %v2560 = vpop.permute.xlu0 %2559
        %2563 = vset.pattern.permute.xlu0 0
        %2564 = vperm.xlu0 %2563, %v2406
        %v2565 = vpop.permute.xlu0 %2564
        %2568 = vset.pattern.permute.xlu0 0
        %2569 = vperm.xlu0 %2568, %v2407
        %v2570 = vpop.permute.xlu0 %2569
        %2573 = vset.pattern.permute.xlu0 0
        %2574 = vperm.xlu0 %2573, %v2408
        %v2575 = vpop.permute.xlu0 %2574
        %2578 = vset.pattern.permute.xlu0 0
        %2579 = vperm.xlu0 %2578, %v2409
        %v2580 = vpop.permute.xlu0 %2579
        %2583 = vset.pattern.permute.xlu0 0
        %2584 = vperm.xlu0 %2583, %v2410
        %v2585 = vpop.permute.xlu0 %2584
        %2588 = vset.pattern.permute.xlu0 0
        %2589 = vperm.xlu0 %2588, %v2411
        %v2590 = vpop.permute.xlu0 %2589
        %v2592 = vmul.f32 %v2304, %v2415
        %v2593 = vmul.f32 %v2305, %v2420
        %v2594 = vmul.f32 %v2306, %v2425
        %v2595 = vmul.f32 %v2307, %v2430
        %v2596 = vmul.f32 %v2308, %v2435
        %v2597 = vmul.f32 %v2309, %v2440
        %v2598 = vmul.f32 %v2310, %v2445
        %v2599 = vmul.f32 %v2311, %v2450
        %v2600 = vmul.f32 %v2312, %v2455
        %v2601 = vmul.f32 %v2313, %v2460
        %v2602 = vmul.f32 %v2314, %v2465
        %v2603 = vmul.f32 %v2315, %v2470
        %v2604 = vmul.f32 %v2316, %v2475
        %v2605 = vmul.f32 %v2317, %v2480
        %v2606 = vmul.f32 %v2318, %v2485
        %v2607 = vmul.f32 %v2319, %v2490
        %v2608 = vmul.f32 %v2320, %v2495
        %v2609 = vmul.f32 %v2321, %v2500
        %v2610 = vmul.f32 %v2322, %v2505
        %v2611 = vmul.f32 %v2323, %v2510
        %v2612 = vmul.f32 %v2324, %v2515
        %v2613 = vmul.f32 %v2325, %v2520
        %v2614 = vmul.f32 %v2326, %v2525
        %v2615 = vmul.f32 %v2327, %v2530
        %v2616 = vmul.f32 %v2328, %v2535
        %v2617 = vmul.f32 %v2329, %v2540
        %v2618 = vmul.f32 %v2330, %v2545
        %v2619 = vmul.f32 %v2331, %v2550
        %v2620 = vmul.f32 %v2332, %v2555
        %v2621 = vmul.f32 %v2333, %v2560
        %v2622 = vmul.f32 %v2334, %v2565
        %v2623 = vmul.f32 %v2335, %v2570
        %v2624 = vmul.f32 %v2336, %v2575
        %v2625 = vmul.f32 %v2337, %v2580
        %v2626 = vmul.f32 %v2338, %v2585
        %v2627 = vmul.f32 %v2339, %v2590
        %v2628 = vadd.f32 %v2592, %v2593
        %v2629 = vadd.f32 %v2628, %v2594
        %v2630 = vadd.f32 %v2629, %v2595
        %v2631 = vadd.f32 %v2630, %v2596
        %v2632 = vadd.f32 %v2631, %v2597
        %v2633 = vadd.f32 %v2632, %v2598
        %v2634 = vadd.f32 %v2633, %v2599
        %v2635 = vadd.f32 %v2634, %v2600
        %v2636 = vadd.f32 %v2635, %v2601
        %v2637 = vadd.f32 %v2636, %v2602
        %v2638 = vadd.f32 %v2637, %v2603
        %v2639 = vadd.f32 %v2638, %v2604
        %v2640 = vadd.f32 %v2639, %v2605
        %v2641 = vadd.f32 %v2640, %v2606
        %v2642 = vadd.f32 %v2641, %v2607
        %v2643 = vadd.f32 %v2642, %v2608
        %v2644 = vadd.f32 %v2643, %v2609
        %v2645 = vadd.f32 %v2644, %v2610
        %v2646 = vadd.f32 %v2645, %v2611
        %v2647 = vadd.f32 %v2646, %v2612
        %v2648 = vadd.f32 %v2647, %v2613
        %v2649 = vadd.f32 %v2648, %v2614
        %v2650 = vadd.f32 %v2649, %v2615
        %v2651 = vadd.f32 %v2650, %v2616
        %v2652 = vadd.f32 %v2651, %v2617
        %v2653 = vadd.f32 %v2652, %v2618
        %v2654 = vadd.f32 %v2653, %v2619
        %v2655 = vadd.f32 %v2654, %v2620
        %v2656 = vadd.f32 %v2655, %v2621
        %v2657 = vadd.f32 %v2656, %v2622
        %v2658 = vadd.f32 %v2657, %v2623
        %v2659 = vadd.f32 %v2658, %v2624
        %v2660 = vadd.f32 %v2659, %v2625
        %v2661 = vadd.f32 %v2660, %v2626
        %v2662 = vadd.f32 %v2661, %v2627
        %v2663 = vrot.slane %v2662, 4
        %v2664 = vadd.f32 %v2662, %v2663
        %v2665 = vrot.slane %v2664, 2
        %v2666 = vadd.f32 %v2664, %v2665
        %v2667 = vrot.slane %v2666, 1
        %v2668 = vadd.f32 %v2666, %v2667
        %v2669 = vmul.f32 %v2592, %v2304
        %v2670 = vmul.f32 %v2593, %v2305
        %v2671 = vmul.f32 %v2594, %v2306
        %v2672 = vmul.f32 %v2595, %v2307
        %v2673 = vmul.f32 %v2596, %v2308
        %v2674 = vmul.f32 %v2597, %v2309
        %v2675 = vmul.f32 %v2598, %v2310
        %v2676 = vmul.f32 %v2599, %v2311
        %v2677 = vmul.f32 %v2600, %v2312
        %v2678 = vmul.f32 %v2601, %v2313
        %v2679 = vmul.f32 %v2602, %v2314
        %v2680 = vmul.f32 %v2603, %v2315
        %v2681 = vmul.f32 %v2604, %v2316
        %v2682 = vmul.f32 %v2605, %v2317
        %v2683 = vmul.f32 %v2606, %v2318
        %v2684 = vmul.f32 %v2607, %v2319
        %v2685 = vmul.f32 %v2608, %v2320
        %v2686 = vmul.f32 %v2609, %v2321
        %v2687 = vmul.f32 %v2610, %v2322
        %v2688 = vmul.f32 %v2611, %v2323
        %v2689 = vmul.f32 %v2612, %v2324
        %v2690 = vmul.f32 %v2613, %v2325
        %v2691 = vmul.f32 %v2614, %v2326
        %v2692 = vmul.f32 %v2615, %v2327
        %v2693 = vmul.f32 %v2616, %v2328
        %v2694 = vmul.f32 %v2617, %v2329
        %v2695 = vmul.f32 %v2618, %v2330
        %v2696 = vmul.f32 %v2619, %v2331
        %v2697 = vmul.f32 %v2620, %v2332
        %v2698 = vmul.f32 %v2621, %v2333
        %v2699 = vmul.f32 %v2622, %v2334
        %v2700 = vmul.f32 %v2623, %v2335
        %v2701 = vmul.f32 %v2624, %v2336
        %v2702 = vmul.f32 %v2625, %v2337
        %v2703 = vmul.f32 %v2626, %v2338
        %v2704 = vmul.f32 %v2627, %v2339
        %v2705 = vadd.f32 %v2669, %v2670
        %v2706 = vadd.f32 %v2705, %v2671
        %v2707 = vadd.f32 %v2706, %v2672
        %v2708 = vadd.f32 %v2707, %v2673
        %v2709 = vadd.f32 %v2708, %v2674
        %v2710 = vadd.f32 %v2709, %v2675
        %v2711 = vadd.f32 %v2710, %v2676
        %v2712 = vadd.f32 %v2711, %v2677
        %v2713 = vadd.f32 %v2712, %v2678
        %v2714 = vadd.f32 %v2713, %v2679
        %v2715 = vadd.f32 %v2714, %v2680
        %v2716 = vadd.f32 %v2715, %v2681
        %v2717 = vadd.f32 %v2716, %v2682
        %v2718 = vadd.f32 %v2717, %v2683
        %v2719 = vadd.f32 %v2718, %v2684
        %v2720 = vadd.f32 %v2719, %v2685
        %v2721 = vadd.f32 %v2720, %v2686
        %v2722 = vadd.f32 %v2721, %v2687
        %v2723 = vadd.f32 %v2722, %v2688
        %v2724 = vadd.f32 %v2723, %v2689
        %v2725 = vadd.f32 %v2724, %v2690
        %v2726 = vadd.f32 %v2725, %v2691
        %v2727 = vadd.f32 %v2726, %v2692
        %v2728 = vadd.f32 %v2727, %v2693
        %v2729 = vadd.f32 %v2728, %v2694
        %v2730 = vadd.f32 %v2729, %v2695
        %v2731 = vadd.f32 %v2730, %v2696
        %v2732 = vadd.f32 %v2731, %v2697
        %v2733 = vadd.f32 %v2732, %v2698
        %v2734 = vadd.f32 %v2733, %v2699
        %v2735 = vadd.f32 %v2734, %v2700
        %v2736 = vadd.f32 %v2735, %v2701
        %v2737 = vadd.f32 %v2736, %v2702
        %v2738 = vadd.f32 %v2737, %v2703
        %v2739 = vadd.f32 %v2738, %v2704
        %v2740 = vrot.slane %v2739, 4
        %v2741 = vadd.f32 %v2739, %v2740
        %v2742 = vrot.slane %v2741, 2
        %v2743 = vadd.f32 %v2741, %v2742
        %v2744 = vrot.slane %v2743, 1
        %v2745 = vadd.f32 %v2743, %v2744
        %vm2746 = vcmask 1040384
        %v2747 = vsel %vm2746, %v2668, %v2745
        %v2748 = vsel %vm516, %v2747, 0.0
        %2749 = vst [vmem:[%s201] sm:$0xff] %v2748
        %s2750 = sand.u32 %s98, 1
        %s2751 = scalar_lea.sflag [#allocation3], %s2750
        %s2752 = sand.u32 %s98, 1
        %s2753 = smul.addr %s2752, 288
        %s2754 = scalar_lea.vmem [#allocation2], %s2753
        %s2755 = sand.u32 %s124, 1
        %s2756 = scalar_lea.sflag [#allocation5], %s2755
        %s2757 = sand.u32 %s124, 1
        %s2758 = smul.addr %s2757, 8
        %s2759 = scalar_lea.vmem [#allocation4], %s2758
        // Predicated region
        $region33: #{tpu_custom_call.1} parent=31 // pred_check
          %p2760 = pneg %p108
        $region34: #{tpu_custom_call.1} parent=31 // pred_check_branch
          %2762 = sbr.rel (%p2760) target = $region36
        $region35: #{tpu_custom_call.1} parent=31 // pred_region
          %2764 = vsyncadd %s2751, 0
          %s2765 = smul.addr %s22, 36
          %s2766 = smul.addr %s2765, 8
          %s2767 = scalar_lea.hbm %s3, %s2766
          %s2768 = sshll.u32 %s2754, 4
          %s2769 = int_to_ptr.vmem [resolvable:$true] %s2768
          %s2770 = sshll.u32 %s2767, 4
          %s2771 = int_to_ptr.hbm [resolvable:$true] %s2770
          %2776 = dma.vmem_to_hbm [thread:$0]  %s2769, 4608, %s2771, %s2751, 128, 128, 8
        $region36: #{tpu_custom_call.1} parent=31 // pred_fallthru
          _
        // Predicated region
        $region37: #{tpu_custom_call.1} parent=31 // pred_check
          %p2777 = pneg %p134
        $region38: #{tpu_custom_call.1} parent=31 // pred_check_branch
          %2779 = sbr.rel (%p2777) target = $region40
        $region39: #{tpu_custom_call.1} parent=31 // pred_region
          %2781 = vsyncadd %s2756, 0
          %s2782 = smul.addr %s22, 8
          %s2783 = scalar_lea.hbm %s4, %s2782
          %s2785 = sshll.u32 %s2759, 4
          %s2786 = int_to_ptr.vmem [resolvable:$true] %s2785
          %s2787 = sshll.u32 %s2783, 4
          %s2788 = int_to_ptr.hbm [resolvable:$true] %s2787
          %2790 = dma.vmem_to_hbm [thread:$0]  %s2786, 128, %s2788, %s2756
        $region40: #{tpu_custom_call.1} parent=31 // pred_fallthru
          _
      $region32: #{tpu_custom_call.1} parent=5 // pred_fallthru
        _
      %p2791 = scmp.le.s32.totalorder 2, %s17
      // Predicated region
      $region41: #{tpu_custom_call.1} parent=5 // pred_check
        %p2792 = pneg %p2791
      $region42: #{tpu_custom_call.1} parent=5 // pred_check_branch
        %2794 = sbr.rel (%p2792) target = $region44
      $region43: #{tpu_custom_call.1} parent=5 // pred_region
        %s2795 = ssub.s32 %s17, 2
        // Predicated region
        $region45: #{tpu_custom_call.1} parent=43 // pred_check
          %p2796 = pneg %p114
        $region46: #{tpu_custom_call.1} parent=43 // pred_check_branch
          %2798 = sbr.rel (%p2796) target = $region48
        $region47: #{tpu_custom_call.1} parent=43 // pred_region
          %s2799 = sand.u32 %s99, 1
          %s2800 = scalar_lea.sflag [#allocation3], %s2799
          %s2801 = sand.u32 %s99, 1
          %s2802 = smul.addr %s2801, 288
          %s2803 = scalar_lea.vmem [#allocation2], %s2802
          %2805 = dma.done %s2800, 4608
        $region48: #{tpu_custom_call.1} parent=43 // pred_fallthru
          _
        // Predicated region
        $region49: #{tpu_custom_call.1} parent=43 // pred_check
          %p2806 = pneg %p140
        $region50: #{tpu_custom_call.1} parent=43 // pred_check_branch
          %2808 = sbr.rel (%p2806) target = $region52
        $region51: #{tpu_custom_call.1} parent=43 // pred_region
          %s2809 = sand.u32 %s125, 1
          %s2810 = scalar_lea.sflag [#allocation5], %s2809
          %s2811 = sand.u32 %s125, 1
          %s2812 = smul.addr %s2811, 8
          %s2813 = scalar_lea.vmem [#allocation4], %s2812
          %2815 = dma.done %s2810, 128
        $region52: #{tpu_custom_call.1} parent=43 // pred_fallthru
          _
      $region44: #{tpu_custom_call.1} parent=5 // pred_fallthru
        _
    $region6: #{tpu_custom_call.1} parent=1 // loop_footer
      %s21 = sadd.s32 1, %s17
    $region7: #{tpu_custom_call.1} parent=1 // loop_footer_branch
      %16 = sbr.rel target = $region3
    $region8: #{tpu_custom_call.1} parent=1 // loop_exit
      _
    %2816 = vsyncpa [#allocation3], 1
    %s2817 = scalar_lea.sflag [#allocation3], 1
    %2818 = vsyncpa %s2817, 1
    %2819 = vsyncpa [#allocation5], 1
    %s2820 = scalar_lea.sflag [#allocation5], 1
    %2821 = vsyncpa %s2820, 1

</llo_original>
